<compile_context>
chip_gen: v7x
topology: tpu7x:2x2x1
jax: 0.10.0
libtpu: 0.0.40
codegen_flags: <defaults>
</compile_context>

<pallas_src>
import jax
import jax.numpy as jnp
from jax.experimental import pallas as pl
from jax.experimental.pallas import tpu as pltpu

H1 = 768          # linear1 in/out, linear3 out, linear4 in
H2 = 1024         # linear2 out / linear3 in
NCLS = 3          # linear4 out
NCLS_PAD = 128    # lane-padded output width
B_TILE = 8        # batch rows per grid step -> sublane-dense (8,128) output block
S_TILE_MAX = 256  # sequence rows per grid step (multiple of 16 for bf16 packing)

HIGH = jax.lax.Precision.HIGHEST


def _make_head_kernel(S, S_TILE):
    """Build the kernel for a given (static) sequence length / tile size."""
    needs_mask = (S % S_TILE) != 0

    def head_kernel(x_ref, wf_ref, bf_ref, out_ref, acc_ref):
        # x_ref:  (B_TILE, S_TILE, 768)   hidden-state tile (bf16 or f32)
        # wf_ref: (768, 128)              folded weight W1@W2@W3@W4 (lane-padded)
        # bf_ref: (1, 128)                S * folded bias (lane-padded)
        # out_ref:(B_TILE, 128)           head output summed over S
        # acc_ref:(B_TILE, 768) f32       sequence-sum accumulator (VMEM scratch)
        si = pl.program_id(1)

        @pl.when(si == 0)
        def _init():
            acc_ref[...] = jnp.zeros_like(acc_ref)

        x = x_ref[...].astype(jnp.float32)
        if needs_mask:
            # Zero out-of-range sequence positions of the partial last S block.
            pos = si * S_TILE + jax.lax.broadcasted_iota(
                jnp.int32, (1, S_TILE, 1), 1)
            x = jnp.where(pos < S, x, 0.0)
        acc_ref[...] += jnp.sum(x, axis=1)  # per-step seq reduction, f32 accumulate

        @pl.when(si == pl.num_programs(1) - 1)
        def _finalize():
            out_ref[...] = (
                jnp.dot(acc_ref[...], wf_ref[...],
                        preferred_element_type=jnp.float32,
                        precision=HIGH)
                + bf_ref[...]
            )

    return head_kernel


@jax.jit
def mlp_head_sum(hidden, w1, b1, w2, b2, w3, b3, w4, b4):
    """hidden: [B, S, 768] (bf16 or f32) -> [B, 3] f32
    (== sum over S of the 4-Linear head, dropout in eval mode)."""
    B, S, _ = hidden.shape

    # ---- fold the affine head once in the wrapper (tiny, amortized) ----------
    wf = jnp.dot(jnp.dot(jnp.dot(w1, w2, precision=HIGH), w3, precision=HIGH),
                 w4, precision=HIGH)                                         # (768, 3)
    bias_f = jnp.dot(jnp.dot(jnp.dot(b1, w2, precision=HIGH) + b2, w3,
                             precision=HIGH) + b3, w4, precision=HIGH) + b4  # (1, 3)

    wf_p = jnp.zeros((H1, NCLS_PAD), jnp.float32).at[:, :NCLS].set(wf)
    bf_p = jnp.zeros((1, NCLS_PAD), jnp.float32).at[:, :NCLS].set(
        jnp.float32(S) * bias_f)

    # ---- tiling: no input padding; partial last blocks handled by Pallas -----
    S_TILE = S if S <= S_TILE_MAX else S_TILE_MAX
    num_b = pl.cdiv(B, B_TILE)
    num_s = pl.cdiv(S, S_TILE)
    B_pad = num_b * B_TILE  # only the tiny output is padded; hidden is NOT copied

    out_padded = pl.pallas_call(
        _make_head_kernel(S, S_TILE),
        out_shape=jax.ShapeDtypeStruct((B_pad, NCLS_PAD), jnp.float32),
        grid_spec=pltpu.PrefetchScalarGridSpec(
            num_scalar_prefetch=0,
            grid=(num_b, num_s),  # reduction (S) axis last
            in_specs=[
                pl.BlockSpec((B_TILE, S_TILE, H1), lambda b, s: (b, s, 0)),  # hidden
                pl.BlockSpec((H1, NCLS_PAD), lambda b, s: (0, 0)),           # folded W
                pl.BlockSpec((1, NCLS_PAD), lambda b, s: (0, 0)),            # S * folded bias
            ],
            out_specs=pl.BlockSpec((B_TILE, NCLS_PAD), lambda b, s: (b, 0)),
            scratch_shapes=[pltpu.VMEM((B_TILE, H1), jnp.float32)],          # seq-sum acc
        ),
        compiler_params=pltpu.CompilerParams(
            dimension_semantics=("parallel", "arbitrary")),
    )(hidden, wf_p, bf_p)

    return out_padded[:B, :NCLS]


def init_params(key):
    """Deterministic parameter init mimicking nn.Linear shapes.

    PyTorch nn.Linear(in, out) stores weight (out, in); we create weights
    directly as (in, out) so the math is x @ W + b.
    """
    ks = jax.random.split(key, 8)
    scale = 0.02
    w1 = scale * jax.random.normal(ks[0], (H1, H1), jnp.float32)
    b1 = scale * jax.random.normal(ks[1], (1, H1), jnp.float32)
    w2 = scale * jax.random.normal(ks[2], (H1, H2), jnp.float32)
    b2 = scale * jax.random.normal(ks[3], (1, H2), jnp.float32)
    w3 = scale * jax.random.normal(ks[4], (H2, H1), jnp.float32)
    b3 = scale * jax.random.normal(ks[5], (1, H1), jnp.float32)
    w4 = scale * jax.random.normal(ks[6], (H1, NCLS), jnp.float32)
    b4 = scale * jax.random.normal(ks[7], (1, NCLS), jnp.float32)
    return (w1, b1, w2, b2, w3, b3, w4, b4)


def roberta_surrogate(input_ids, attention_mask, embed_table):
    """Deterministic stand-in for self.l1.roberta(...)[0] -> [B, S, 768] bf16.

    TODO(synk): the real pretrained RoBERTa encoder has no Pallas equivalent
    without its checkpoint; this is a simple embedding lookup masked by the
    attention mask. Hidden states are emitted in bf16 so the head kernel
    streams half the HBM bytes.
    """
    h = embed_table[input_ids]                               # [B, S, 768] f32
    h = h * attention_mask[..., None].astype(h.dtype)
    return h.astype(jnp.bfloat16)


if __name__ == "__main__":
    key = jax.random.PRNGKey(0)
    k_ids, k_emb, k_params = jax.random.split(key, 3)

    B, S, VOCAB = 2, 8, 64  # small demo shapes
    input_ids = jax.random.randint(k_ids, (B, S), 0, VOCAB, dtype=jnp.int32)
    attention_mask = jnp.ones((B, S), dtype=jnp.int32)
    token_type_ids = jnp.zeros((B, S), dtype=jnp.int32)  # unused, as in torch forward

    embed_table = 0.02 * jax.random.normal(k_emb, (VOCAB, H1), jnp.float32)
    w1, b1, w2, b2, w3, b3, w4, b4 = init_params(k_params)

    hidden = roberta_surrogate(input_ids, attention_mask, embed_table)  # [B, S, 768] bf16

    out = mlp_head_sum(hidden, w1, b1, w2, b2, w3, b3, w4, b4)  # [B, 3]
    out = jax.block_until_ready(out)

    # reference check: the ORIGINAL 4-Linear chain + sum over S, in plain JAX,
    # on the same (bf16-streamed, upcast) hidden states.
    h32 = hidden.astype(jnp.float32)
    ref = jnp.matmul(h32, w1, precision=HIGH) + b1
    ref = jnp.matmul(ref, w2, precision=HIGH) + b2
    ref = jnp.matmul(ref, w3, precision=HIGH) + b3
    ref = jnp.matmul(ref, w4, precision=HIGH) + b4
    ref = jnp.sum(ref, axis=1)

    assert out.shape == (B, NCLS)
    assert jnp.allclose(out, ref, atol=5e-4, rtol=5e-4)

    print("KERNEL_OK")
</pallas_src>

<mosaic_0001>
module attributes {stable_mosaic.version = 11 : i64} {
  func.func @head_kernel(%arg0: i32, %arg1: i32, %arg2: memref<8x8x768xbf16, #tpu.memory_space<vmem>>, %arg3: memref<768x128xf32, #tpu.memory_space<vmem>>, %arg4: memref<1x128xf32, #tpu.memory_space<vmem>>, %arg5: memref<8x128xf32, #tpu.memory_space<vmem>>, %arg6: memref<8x768xf32, #tpu.memory_space<vmem>>) attributes {dimension_semantics = [#tpu.dimension_semantics<parallel>, #tpu.dimension_semantics<arbitrary>], iteration_bounds = array<i64: 1, 1>, scalar_prefetch = 0 : i64, scratch_operands = 1 : i64, tpu.core_type = #tpu.core_type<tc>, window_params = [{transform_indices = @transform_0, window_bounds = array<i64: 8, 8, 768>}, {pipeline_mode = #tpu.pipeline_mode<synchronous>, transform_indices = @transform_1, window_bounds = array<i64: 768, 128>}, {pipeline_mode = #tpu.pipeline_mode<synchronous>, transform_indices = @transform_2, window_bounds = array<i64: 1, 128>}, {transform_indices = @transform_3, window_bounds = array<i64: 8, 128>}]} {
    %c0_i32 = arith.constant 0 : i32
    %0 = arith.cmpi eq, %arg1, %c0_i32 : i32
    %1 = arith.extui %0 : i1 to i32
    %c0_i32_0 = arith.constant 0 : i32
    %2 = arith.cmpi ne, %1, %c0_i32_0 : i32
    scf.if %2 {
      %cst_9 = arith.constant 0.000000e+00 : f32
      %12 = vector.broadcast %cst_9 : f32 to vector<8x768xf32>
      %c0_10 = arith.constant 0 : index
      %c0_11 = arith.constant 0 : index
      %13 = vector.load %arg6[%c0_10, %c0_11] : memref<8x768xf32, #tpu.memory_space<vmem>>, vector<8x768xf32>
      tpu.vector_store %arg6[%c0_10, %c0_11], %12 {strides = array<i32>} : memref<8x768xf32, #tpu.memory_space<vmem>>, vector<8x768xf32>,
    } else {
    }
    %c0 = arith.constant 0 : index
    %c0_1 = arith.constant 0 : index
    %c0_2 = arith.constant 0 : index
    %3 = vector.load %arg2[%c0, %c0_1, %c0_2] : memref<8x8x768xbf16, #tpu.memory_space<vmem>>, vector<8x8x768xbf16>
    %4 = arith.extf %3 : vector<8x8x768xbf16> to vector<8x8x768xf32>
    %c0_3 = arith.constant 0 : index
    %c0_4 = arith.constant 0 : index
    %5 = vector.load %arg6[%c0_3, %c0_4] : memref<8x768xf32, #tpu.memory_space<vmem>>, vector<8x768xf32>
    %cst = arith.constant dense<0.000000e+00> : vector<8x768xf32>
    %6 = vector.multi_reduction <add>, %4, %cst [1] : vector<8x8x768xf32> to vector<8x768xf32>
    %7 = arith.addf %5, %6 : vector<8x768xf32>
    %c0_5 = arith.constant 0 : index
    %c0_6 = arith.constant 0 : index
    %8 = vector.load %arg6[%c0_5, %c0_6] : memref<8x768xf32, #tpu.memory_space<vmem>>, vector<8x768xf32>
    tpu.vector_store %arg6[%c0_5, %c0_6], %7 {strides = array<i32>} : memref<8x768xf32, #tpu.memory_space<vmem>>, vector<8x768xf32>,
    %c0_i32_7 = arith.constant 0 : i32
    %9 = arith.cmpi eq, %arg1, %c0_i32_7 : i32
    %10 = arith.extui %9 : i1 to i32
    %c0_i32_8 = arith.constant 0 : i32
    %11 = arith.cmpi ne, %10, %c0_i32_8 : i32
    scf.if %11 {
      %c0_9 = arith.constant 0 : index
      %c0_10 = arith.constant 0 : index
      %12 = vector.load %arg6[%c0_9, %c0_10] : memref<8x768xf32, #tpu.memory_space<vmem>>, vector<8x768xf32>
      %c0_11 = arith.constant 0 : index
      %c0_12 = arith.constant 0 : index
      %13 = vector.load %arg3[%c0_11, %c0_12] : memref<768x128xf32, #tpu.memory_space<vmem>>, vector<768x128xf32>
      %cst_13 = arith.constant dense<0.000000e+00> : vector<8x128xf32>
      %14 = tpu.matmul %12, %13, %cst_13 {dimension_numbers = #tpu.dot_dimension_numbers<[1], [0], [0], [1], [0, 0, 1, 1], [], []>, precision = #tpu.contract_precision<fp32>} : vector<8x768xf32>, vector<768x128xf32>, vector<8x128xf32> -> vector<8x128xf32>
      %c0_14 = arith.constant 0 : index
      %c0_15 = arith.constant 0 : index
      %15 = vector.load %arg4[%c0_14, %c0_15] : memref<1x128xf32, #tpu.memory_space<vmem>>, vector<1x128xf32>
      %16 = vector.broadcast %15 : vector<1x128xf32> to vector<8x128xf32>
      %17 = arith.addf %14, %16 : vector<8x128xf32>
      %c0_16 = arith.constant 0 : index
      %c0_17 = arith.constant 0 : index
      %18 = vector.load %arg5[%c0_16, %c0_17] : memref<8x128xf32, #tpu.memory_space<vmem>>, vector<8x128xf32>
      tpu.vector_store %arg5[%c0_16, %c0_17], %17 {strides = array<i32>} : memref<8x128xf32, #tpu.memory_space<vmem>>, vector<8x128xf32>,
    } else {
    }
    return
  }
  func.func @transform_0(%arg0: i32, %arg1: i32) -> (i32, i32, i32) {
    %c0_i32 = arith.constant 0 : i32
    %c0_i32_0 = arith.constant 0 : i32
    return %arg0, %arg1, %c0_i32 : i32, i32, i32
  }
  func.func @transform_1(%arg0: i32, %arg1: i32) -> (i32, i32) {
    %c0_i32 = arith.constant 0 : i32
    %c0_i32_0 = arith.constant 0 : i32
    %c0_i32_1 = arith.constant 0 : i32
    return %c0_i32, %c0_i32_0 : i32, i32
  }
  func.func @transform_2(%arg0: i32, %arg1: i32) -> (i32, i32) {
    %c0_i32 = arith.constant 0 : i32
    %c0_i32_0 = arith.constant 0 : i32
    %c0_i32_1 = arith.constant 0 : i32
    return %c0_i32, %c0_i32_0 : i32, i32
  }
  func.func @transform_3(%arg0: i32, %arg1: i32) -> (i32, i32) {
    %c0_i32 = arith.constant 0 : i32
    %c0_i32_0 = arith.constant 0 : i32
    return %arg0, %c0_i32 : i32, i32
  }
}

</mosaic_0001>

<llo_original>
// kernel: mlp_head_sum.1
$region0: #{mlp_head_sum.1}
  #allocation0 [shape = 'u32[]', space=smem, size = 0x4, offset = 0x4, fixed_abs, tag = 'smem constant byte address 0x4 - core index']
  #allocation1 [shape = 'u32[144,128]{1,0:T(1,128)}', space=vmem, size = 0x12000, scoped, tag = 'internal scratch']
  #allocation2 [shape = 'f32[8,768]{1,0:T(8,128)}', space=vmem, size = 0x6000, scoped, tag = 'scratch operand']
  %s0 = inlined_call_operand.vmem [shape: bf16[2,8,768], index: 0, kind: input, shape index: {}]
  %s1 = inlined_call_operand.vmem [shape: f32[768,128], index: 1, kind: input, shape index: {}]
  %s2 = inlined_call_operand.vmem [shape: f32[1,128], index: 2, kind: input, shape index: {}]
  %s3 = inlined_call_operand.vmem [shape: f32[8,128], index: 3, kind: output, shape index: {}]
  %s4 = sld [smem:[#allocation0]]
  $region30: #{mlp_head_sum.1} parent=0
    _
  %s6 = ssub.s32 1, %s4
  %s7 = scalar_select 0, %s6, %s4
  // Predicated region
  $region2: #{mlp_head_sum.1} parent=0 // pred_check
    _
  $region3: #{mlp_head_sum.1} parent=0 // pred_check_branch
    %9 = sbr.rel (0) target = $region5
  $region4: #{mlp_head_sum.1} parent=0 // pred_region
    _
  $region5: #{mlp_head_sum.1} parent=0 // pred_fallthru
    _
  // Predicated region
  $region6: #{mlp_head_sum.1} parent=0 // pred_check
    _
  $region7: #{mlp_head_sum.1} parent=0 // pred_check_branch
    %11 = sbr.rel (0) target = $region9
  $region8: #{mlp_head_sum.1} parent=0 // pred_region
    _
  $region9: #{mlp_head_sum.1} parent=0 // pred_fallthru
    _
  // Predicated region
  $region10: #{mlp_head_sum.1} parent=0 // pred_check
    _
  $region11: #{mlp_head_sum.1} parent=0 // pred_check_branch
    %13 = sbr.rel (0) target = $region13
  $region12: #{mlp_head_sum.1} parent=0 // pred_region
    _
  $region13: #{mlp_head_sum.1} parent=0 // pred_fallthru
    _
  %p14 = scmp.eq.s32.totalorder 0, 0
  // Predicated region
  $region14: #{mlp_head_sum.1} parent=0 // pred_check
    %p15 = pneg %p14
  $region15: #{mlp_head_sum.1} parent=0 // pred_check_branch
    %17 = sbr.rel (%p15) target = $region17
  $region16: #{mlp_head_sum.1} parent=0 // pred_region
    %18 = vst [vmem:[#allocation2] sm:$0xff] 0.0
    %19 = vst [vmem:[#allocation2 + $0x8] sm:$0xff] 0.0
    %20 = vst [vmem:[#allocation2 + $0x10] sm:$0xff] 0.0
    %21 = vst [vmem:[#allocation2 + $0x18] sm:$0xff] 0.0
    %22 = vst [vmem:[#allocation2 + $0x20] sm:$0xff] 0.0
    %23 = vst [vmem:[#allocation2 + $0x28] sm:$0xff] 0.0
  $region17: #{mlp_head_sum.1} parent=0 // pred_fallthru
    _
  %v24 = vld [vmem:[%s0] sm:$0xff]
  %v25 = vld [vmem:[%s0 + $0x8] sm:$0xff]
  %v26 = vld [vmem:[%s0 + $0x10] sm:$0xff]
  %v27 = vld [vmem:[%s0 + $0x18] sm:$0xff]
  %v28 = vld [vmem:[%s0 + $0x20] sm:$0xff]
  %v29 = vld [vmem:[%s0 + $0x28] sm:$0xff]
  %v30 = vld [vmem:[%s0 + $0x30] sm:$0xff]
  %v31 = vld [vmem:[%s0 + $0x38] sm:$0xff]
  %v32 = vld [vmem:[%s0 + $0x40] sm:$0xff]
  %v33 = vld [vmem:[%s0 + $0x48] sm:$0xff]
  %v34 = vld [vmem:[%s0 + $0x50] sm:$0xff]
  %v35 = vld [vmem:[%s0 + $0x58] sm:$0xff]
  %v36 = vld [vmem:[%s0 + $0x60] sm:$0xff]
  %v37 = vld [vmem:[%s0 + $0x68] sm:$0xff]
  %v38 = vld [vmem:[%s0 + $0x70] sm:$0xff]
  %v39 = vld [vmem:[%s0 + $0x78] sm:$0xff]
  %v40 = vld [vmem:[%s0 + $0x80] sm:$0xff]
  %v41 = vld [vmem:[%s0 + $0x88] sm:$0xff]
  %v42 = vld [vmem:[%s0 + $0x90] sm:$0xff]
  %v43 = vld [vmem:[%s0 + $0x98] sm:$0xff]
  %v44 = vld [vmem:[%s0 + $0xa0] sm:$0xff]
  %v45 = vld [vmem:[%s0 + $0xa8] sm:$0xff]
  %v46 = vld [vmem:[%s0 + $0xb0] sm:$0xff]
  %v47 = vld [vmem:[%s0 + $0xb8] sm:$0xff]
  %v48 = vunpack.c.l.bf16 %v24
  %v49 = vunpack.c.h.bf16 %v24
  %v50 = vunpack.c.l.bf16 %v25
  %v51 = vunpack.c.h.bf16 %v25
  %v52 = vunpack.c.l.bf16 %v26
  %v53 = vunpack.c.h.bf16 %v26
  %v54 = vunpack.c.l.bf16 %v27
  %v55 = vunpack.c.h.bf16 %v27
  %v56 = vunpack.c.l.bf16 %v28
  %v57 = vunpack.c.h.bf16 %v28
  %v58 = vunpack.c.l.bf16 %v29
  %v59 = vunpack.c.h.bf16 %v29
  %v60 = vunpack.c.l.bf16 %v30
  %v61 = vunpack.c.h.bf16 %v30
  %v62 = vunpack.c.l.bf16 %v31
  %v63 = vunpack.c.h.bf16 %v31
  %v64 = vunpack.c.l.bf16 %v32
  %v65 = vunpack.c.h.bf16 %v32
  %v66 = vunpack.c.l.bf16 %v33
  %v67 = vunpack.c.h.bf16 %v33
  %v68 = vunpack.c.l.bf16 %v34
  %v69 = vunpack.c.h.bf16 %v34
  %v70 = vunpack.c.l.bf16 %v35
  %v71 = vunpack.c.h.bf16 %v35
  %v72 = vunpack.c.l.bf16 %v36
  %v73 = vunpack.c.h.bf16 %v36
  %v74 = vunpack.c.l.bf16 %v37
  %v75 = vunpack.c.h.bf16 %v37
  %v76 = vunpack.c.l.bf16 %v38
  %v77 = vunpack.c.h.bf16 %v38
  %v78 = vunpack.c.l.bf16 %v39
  %v79 = vunpack.c.h.bf16 %v39
  %v80 = vunpack.c.l.bf16 %v40
  %v81 = vunpack.c.h.bf16 %v40
  %v82 = vunpack.c.l.bf16 %v41
  %v83 = vunpack.c.h.bf16 %v41
  %v84 = vunpack.c.l.bf16 %v42
  %v85 = vunpack.c.h.bf16 %v42
  %v86 = vunpack.c.l.bf16 %v43
  %v87 = vunpack.c.h.bf16 %v43
  %v88 = vunpack.c.l.bf16 %v44
  %v89 = vunpack.c.h.bf16 %v44
  %v90 = vunpack.c.l.bf16 %v45
  %v91 = vunpack.c.h.bf16 %v45
  %v92 = vunpack.c.l.bf16 %v46
  %v93 = vunpack.c.h.bf16 %v46
  %v94 = vunpack.c.l.bf16 %v47
  %v95 = vunpack.c.h.bf16 %v47
  %v96 = vld [vmem:[#allocation2] sm:$0xff]
  %v97 = vld [vmem:[#allocation2 + $0x8] sm:$0xff]
  %v98 = vld [vmem:[#allocation2 + $0x10] sm:$0xff]
  %v99 = vld [vmem:[#allocation2 + $0x18] sm:$0xff]
  %v100 = vld [vmem:[#allocation2 + $0x20] sm:$0xff]
  %v101 = vld [vmem:[#allocation2 + $0x28] sm:$0xff]
  %v102 = vrot.slane %v48, 4
  %v103 = vadd.f32 %v48, %v102
  %v104 = vrot.slane %v103, 2
  %v105 = vadd.f32 %v103, %v104
  %v106 = vrot.slane %v105, 1
  %v107 = vadd.f32 %v105, %v106
  %v108 = vrot.slane %v49, 4
  %v109 = vadd.f32 %v49, %v108
  %v110 = vrot.slane %v109, 2
  %v111 = vadd.f32 %v109, %v110
  %v112 = vrot.slane %v111, 1
  %v113 = vadd.f32 %v111, %v112
  %v114 = vrot.slane %v50, 4
  %v115 = vadd.f32 %v50, %v114
  %v116 = vrot.slane %v115, 2
  %v117 = vadd.f32 %v115, %v116
  %v118 = vrot.slane %v117, 1
  %v119 = vadd.f32 %v117, %v118
  %v120 = vrot.slane %v51, 4
  %v121 = vadd.f32 %v51, %v120
  %v122 = vrot.slane %v121, 2
  %v123 = vadd.f32 %v121, %v122
  %v124 = vrot.slane %v123, 1
  %v125 = vadd.f32 %v123, %v124
  %v126 = vrot.slane %v52, 4
  %v127 = vadd.f32 %v52, %v126
  %v128 = vrot.slane %v127, 2
  %v129 = vadd.f32 %v127, %v128
  %v130 = vrot.slane %v129, 1
  %v131 = vadd.f32 %v129, %v130
  %v132 = vrot.slane %v53, 4
  %v133 = vadd.f32 %v53, %v132
  %v134 = vrot.slane %v133, 2
  %v135 = vadd.f32 %v133, %v134
  %v136 = vrot.slane %v135, 1
  %v137 = vadd.f32 %v135, %v136
  %v138 = vrot.slane %v54, 4
  %v139 = vadd.f32 %v54, %v138
  %v140 = vrot.slane %v139, 2
  %v141 = vadd.f32 %v139, %v140
  %v142 = vrot.slane %v141, 1
  %v143 = vadd.f32 %v141, %v142
  %v144 = vrot.slane %v55, 4
  %v145 = vadd.f32 %v55, %v144
  %v146 = vrot.slane %v145, 2
  %v147 = vadd.f32 %v145, %v146
  %v148 = vrot.slane %v147, 1
  %v149 = vadd.f32 %v147, %v148
  %v150 = vrot.slane %v56, 4
  %v151 = vadd.f32 %v56, %v150
  %v152 = vrot.slane %v151, 2
  %v153 = vadd.f32 %v151, %v152
  %v154 = vrot.slane %v153, 1
  %v155 = vadd.f32 %v153, %v154
  %v156 = vrot.slane %v57, 4
  %v157 = vadd.f32 %v57, %v156
  %v158 = vrot.slane %v157, 2
  %v159 = vadd.f32 %v157, %v158
  %v160 = vrot.slane %v159, 1
  %v161 = vadd.f32 %v159, %v160
  %v162 = vrot.slane %v58, 4
  %v163 = vadd.f32 %v58, %v162
  %v164 = vrot.slane %v163, 2
  %v165 = vadd.f32 %v163, %v164
  %v166 = vrot.slane %v165, 1
  %v167 = vadd.f32 %v165, %v166
  %v168 = vrot.slane %v59, 4
  %v169 = vadd.f32 %v59, %v168
  %v170 = vrot.slane %v169, 2
  %v171 = vadd.f32 %v169, %v170
  %v172 = vrot.slane %v171, 1
  %v173 = vadd.f32 %v171, %v172
  %v174 = vrot.slane %v60, 4
  %v175 = vadd.f32 %v60, %v174
  %v176 = vrot.slane %v175, 2
  %v177 = vadd.f32 %v175, %v176
  %v178 = vrot.slane %v177, 1
  %v179 = vadd.f32 %v177, %v178
  %v180 = vrot.slane %v61, 4
  %v181 = vadd.f32 %v61, %v180
  %v182 = vrot.slane %v181, 2
  %v183 = vadd.f32 %v181, %v182
  %v184 = vrot.slane %v183, 1
  %v185 = vadd.f32 %v183, %v184
  %v186 = vrot.slane %v62, 4
  %v187 = vadd.f32 %v62, %v186
  %v188 = vrot.slane %v187, 2
  %v189 = vadd.f32 %v187, %v188
  %v190 = vrot.slane %v189, 1
  %v191 = vadd.f32 %v189, %v190
  %v192 = vrot.slane %v63, 4
  %v193 = vadd.f32 %v63, %v192
  %v194 = vrot.slane %v193, 2
  %v195 = vadd.f32 %v193, %v194
  %v196 = vrot.slane %v195, 1
  %v197 = vadd.f32 %v195, %v196
  %v198 = vrot.slane %v64, 4
  %v199 = vadd.f32 %v64, %v198
  %v200 = vrot.slane %v199, 2
  %v201 = vadd.f32 %v199, %v200
  %v202 = vrot.slane %v201, 1
  %v203 = vadd.f32 %v201, %v202
  %v204 = vrot.slane %v65, 4
  %v205 = vadd.f32 %v65, %v204
  %v206 = vrot.slane %v205, 2
  %v207 = vadd.f32 %v205, %v206
  %v208 = vrot.slane %v207, 1
  %v209 = vadd.f32 %v207, %v208
  %v210 = vrot.slane %v66, 4
  %v211 = vadd.f32 %v66, %v210
  %v212 = vrot.slane %v211, 2
  %v213 = vadd.f32 %v211, %v212
  %v214 = vrot.slane %v213, 1
  %v215 = vadd.f32 %v213, %v214
  %v216 = vrot.slane %v67, 4
  %v217 = vadd.f32 %v67, %v216
  %v218 = vrot.slane %v217, 2
  %v219 = vadd.f32 %v217, %v218
  %v220 = vrot.slane %v219, 1
  %v221 = vadd.f32 %v219, %v220
  %v222 = vrot.slane %v68, 4
  %v223 = vadd.f32 %v68, %v222
  %v224 = vrot.slane %v223, 2
  %v225 = vadd.f32 %v223, %v224
  %v226 = vrot.slane %v225, 1
  %v227 = vadd.f32 %v225, %v226
  %v228 = vrot.slane %v69, 4
  %v229 = vadd.f32 %v69, %v228
  %v230 = vrot.slane %v229, 2
  %v231 = vadd.f32 %v229, %v230
  %v232 = vrot.slane %v231, 1
  %v233 = vadd.f32 %v231, %v232
  %v234 = vrot.slane %v70, 4
  %v235 = vadd.f32 %v70, %v234
  %v236 = vrot.slane %v235, 2
  %v237 = vadd.f32 %v235, %v236
  %v238 = vrot.slane %v237, 1
  %v239 = vadd.f32 %v237, %v238
  %v240 = vrot.slane %v71, 4
  %v241 = vadd.f32 %v71, %v240
  %v242 = vrot.slane %v241, 2
  %v243 = vadd.f32 %v241, %v242
  %v244 = vrot.slane %v243, 1
  %v245 = vadd.f32 %v243, %v244
  %v246 = vrot.slane %v72, 4
  %v247 = vadd.f32 %v72, %v246
  %v248 = vrot.slane %v247, 2
  %v249 = vadd.f32 %v247, %v248
  %v250 = vrot.slane %v249, 1
  %v251 = vadd.f32 %v249, %v250
  %v252 = vrot.slane %v73, 4
  %v253 = vadd.f32 %v73, %v252
  %v254 = vrot.slane %v253, 2
  %v255 = vadd.f32 %v253, %v254
  %v256 = vrot.slane %v255, 1
  %v257 = vadd.f32 %v255, %v256
  %v258 = vrot.slane %v74, 4
  %v259 = vadd.f32 %v74, %v258
  %v260 = vrot.slane %v259, 2
  %v261 = vadd.f32 %v259, %v260
  %v262 = vrot.slane %v261, 1
  %v263 = vadd.f32 %v261, %v262
  %v264 = vrot.slane %v75, 4
  %v265 = vadd.f32 %v75, %v264
  %v266 = vrot.slane %v265, 2
  %v267 = vadd.f32 %v265, %v266
  %v268 = vrot.slane %v267, 1
  %v269 = vadd.f32 %v267, %v268
  %v270 = vrot.slane %v76, 4
  %v271 = vadd.f32 %v76, %v270
  %v272 = vrot.slane %v271, 2
  %v273 = vadd.f32 %v271, %v272
  %v274 = vrot.slane %v273, 1
  %v275 = vadd.f32 %v273, %v274
  %v276 = vrot.slane %v77, 4
  %v277 = vadd.f32 %v77, %v276
  %v278 = vrot.slane %v277, 2
  %v279 = vadd.f32 %v277, %v278
  %v280 = vrot.slane %v279, 1
  %v281 = vadd.f32 %v279, %v280
  %v282 = vrot.slane %v78, 4
  %v283 = vadd.f32 %v78, %v282
  %v284 = vrot.slane %v283, 2
  %v285 = vadd.f32 %v283, %v284
  %v286 = vrot.slane %v285, 1
  %v287 = vadd.f32 %v285, %v286
  %v288 = vrot.slane %v79, 4
  %v289 = vadd.f32 %v79, %v288
  %v290 = vrot.slane %v289, 2
  %v291 = vadd.f32 %v289, %v290
  %v292 = vrot.slane %v291, 1
  %v293 = vadd.f32 %v291, %v292
  %v294 = vrot.slane %v80, 4
  %v295 = vadd.f32 %v80, %v294
  %v296 = vrot.slane %v295, 2
  %v297 = vadd.f32 %v295, %v296
  %v298 = vrot.slane %v297, 1
  %v299 = vadd.f32 %v297, %v298
  %v300 = vrot.slane %v81, 4
  %v301 = vadd.f32 %v81, %v300
  %v302 = vrot.slane %v301, 2
  %v303 = vadd.f32 %v301, %v302
  %v304 = vrot.slane %v303, 1
  %v305 = vadd.f32 %v303, %v304
  %v306 = vrot.slane %v82, 4
  %v307 = vadd.f32 %v82, %v306
  %v308 = vrot.slane %v307, 2
  %v309 = vadd.f32 %v307, %v308
  %v310 = vrot.slane %v309, 1
  %v311 = vadd.f32 %v309, %v310
  %v312 = vrot.slane %v83, 4
  %v313 = vadd.f32 %v83, %v312
  %v314 = vrot.slane %v313, 2
  %v315 = vadd.f32 %v313, %v314
  %v316 = vrot.slane %v315, 1
  %v317 = vadd.f32 %v315, %v316
  %v318 = vrot.slane %v84, 4
  %v319 = vadd.f32 %v84, %v318
  %v320 = vrot.slane %v319, 2
  %v321 = vadd.f32 %v319, %v320
  %v322 = vrot.slane %v321, 1
  %v323 = vadd.f32 %v321, %v322
  %v324 = vrot.slane %v85, 4
  %v325 = vadd.f32 %v85, %v324
  %v326 = vrot.slane %v325, 2
  %v327 = vadd.f32 %v325, %v326
  %v328 = vrot.slane %v327, 1
  %v329 = vadd.f32 %v327, %v328
  %v330 = vrot.slane %v86, 4
  %v331 = vadd.f32 %v86, %v330
  %v332 = vrot.slane %v331, 2
  %v333 = vadd.f32 %v331, %v332
  %v334 = vrot.slane %v333, 1
  %v335 = vadd.f32 %v333, %v334
  %v336 = vrot.slane %v87, 4
  %v337 = vadd.f32 %v87, %v336
  %v338 = vrot.slane %v337, 2
  %v339 = vadd.f32 %v337, %v338
  %v340 = vrot.slane %v339, 1
  %v341 = vadd.f32 %v339, %v340
  %v342 = vrot.slane %v88, 4
  %v343 = vadd.f32 %v88, %v342
  %v344 = vrot.slane %v343, 2
  %v345 = vadd.f32 %v343, %v344
  %v346 = vrot.slane %v345, 1
  %v347 = vadd.f32 %v345, %v346
  %v348 = vrot.slane %v89, 4
  %v349 = vadd.f32 %v89, %v348
  %v350 = vrot.slane %v349, 2
  %v351 = vadd.f32 %v349, %v350
  %v352 = vrot.slane %v351, 1
  %v353 = vadd.f32 %v351, %v352
  %v354 = vrot.slane %v90, 4
  %v355 = vadd.f32 %v90, %v354
  %v356 = vrot.slane %v355, 2
  %v357 = vadd.f32 %v355, %v356
  %v358 = vrot.slane %v357, 1
  %v359 = vadd.f32 %v357, %v358
  %v360 = vrot.slane %v91, 4
  %v361 = vadd.f32 %v91, %v360
  %v362 = vrot.slane %v361, 2
  %v363 = vadd.f32 %v361, %v362
  %v364 = vrot.slane %v363, 1
  %v365 = vadd.f32 %v363, %v364
  %v366 = vrot.slane %v92, 4
  %v367 = vadd.f32 %v92, %v366
  %v368 = vrot.slane %v367, 2
  %v369 = vadd.f32 %v367, %v368
  %v370 = vrot.slane %v369, 1
  %v371 = vadd.f32 %v369, %v370
  %v372 = vrot.slane %v93, 4
  %v373 = vadd.f32 %v93, %v372
  %v374 = vrot.slane %v373, 2
  %v375 = vadd.f32 %v373, %v374
  %v376 = vrot.slane %v375, 1
  %v377 = vadd.f32 %v375, %v376
  %v378 = vrot.slane %v94, 4
  %v379 = vadd.f32 %v94, %v378
  %v380 = vrot.slane %v379, 2
  %v381 = vadd.f32 %v379, %v380
  %v382 = vrot.slane %v381, 1
  %v383 = vadd.f32 %v381, %v382
  %v384 = vrot.slane %v95, 4
  %v385 = vadd.f32 %v95, %v384
  %v386 = vrot.slane %v385, 2
  %v387 = vadd.f32 %v385, %v386
  %v388 = vrot.slane %v387, 1
  %v389 = vadd.f32 %v387, %v388
  %vm438 = vcmask 1041409
  %v439 = vsel %vm438, %v143, %v107
  %vm440 = vcmask 1042434
  %v441 = vsel %vm440, %v179, %v439
  %vm442 = vcmask 1043459
  %v443 = vsel %vm442, %v215, %v441
  %vm444 = vcmask 1044484
  %v445 = vsel %vm444, %v251, %v443
  %vm446 = vcmask 1045509
  %v447 = vsel %vm446, %v287, %v445
  %vm448 = vcmask 1046534
  %v449 = vsel %vm448, %v323, %v447
  %vm450 = vcmask 1047559
  %v451 = vsel %vm450, %v359, %v449
  %v452 = vsel %vm438, %v149, %v113
  %v453 = vsel %vm440, %v185, %v452
  %v454 = vsel %vm442, %v221, %v453
  %v455 = vsel %vm444, %v257, %v454
  %v456 = vsel %vm446, %v293, %v455
  %v457 = vsel %vm448, %v329, %v456
  %v458 = vsel %vm450, %v365, %v457
  %v459 = vsel %vm438, %v155, %v119
  %v460 = vsel %vm440, %v191, %v459
  %v461 = vsel %vm442, %v227, %v460
  %v462 = vsel %vm444, %v263, %v461
  %v463 = vsel %vm446, %v299, %v462
  %v464 = vsel %vm448, %v335, %v463
  %v465 = vsel %vm450, %v371, %v464
  %v466 = vsel %vm438, %v161, %v125
  %v467 = vsel %vm440, %v197, %v466
  %v468 = vsel %vm442, %v233, %v467
  %v469 = vsel %vm444, %v269, %v468
  %v470 = vsel %vm446, %v305, %v469
  %v471 = vsel %vm448, %v341, %v470
  %v472 = vsel %vm450, %v377, %v471
  %v473 = vsel %vm438, %v167, %v131
  %v474 = vsel %vm440, %v203, %v473
  %v475 = vsel %vm442, %v239, %v474
  %v476 = vsel %vm444, %v275, %v475
  %v477 = vsel %vm446, %v311, %v476
  %v478 = vsel %vm448, %v347, %v477
  %v479 = vsel %vm450, %v383, %v478
  %v480 = vsel %vm438, %v173, %v137
  %v481 = vsel %vm440, %v209, %v480
  %v482 = vsel %vm442, %v245, %v481
  %v483 = vsel %vm444, %v281, %v482
  %v484 = vsel %vm446, %v317, %v483
  %v485 = vsel %vm448, %v353, %v484
  %v486 = vsel %vm450, %v389, %v485
  %v493 = vadd.f32 %v96, %v451
  %v494 = vadd.f32 %v97, %v458
  %v495 = vadd.f32 %v98, %v465
  %v496 = vadd.f32 %v99, %v472
  %v497 = vadd.f32 %v100, %v479
  %v498 = vadd.f32 %v101, %v486
  %499 = vst [vmem:[#allocation2] sm:$0xff] %v493
  %500 = vst [vmem:[#allocation2 + $0x8] sm:$0xff] %v494
  %501 = vst [vmem:[#allocation2 + $0x10] sm:$0xff] %v495
  %502 = vst [vmem:[#allocation2 + $0x18] sm:$0xff] %v496
  %503 = vst [vmem:[#allocation2 + $0x20] sm:$0xff] %v497
  %504 = vst [vmem:[#allocation2 + $0x28] sm:$0xff] %v498
  // Predicated region
  $region18: #{mlp_head_sum.1} parent=0 // pred_check
    %p505 = pneg %p14
  $region19: #{mlp_head_sum.1} parent=0 // pred_check_branch
    %507 = sbr.rel (%p505) target = $region21
  $region20: #{mlp_head_sum.1} parent=0 // pred_region
    %v508 = vld [vmem:[#allocation2] sm:$0xff]
    %v509 = vld [vmem:[#allocation2 + $0x8] sm:$0xff]
    %v510 = vld [vmem:[#allocation2 + $0x10] sm:$0xff]
    %v511 = vld [vmem:[#allocation2 + $0x18] sm:$0xff]
    %v512 = vld [vmem:[#allocation2 + $0x20] sm:$0xff]
    %v513 = vld [vmem:[#allocation2 + $0x28] sm:$0xff]
    %v514 = vld [vmem:[%s1] sm:$0xff]
    %v515 = vld [vmem:[%s1 + $0x8] sm:$0xff]
    %v516 = vld [vmem:[%s1 + $0x10] sm:$0xff]
    %v517 = vld [vmem:[%s1 + $0x18] sm:$0xff]
    %v518 = vld [vmem:[%s1 + $0x20] sm:$0xff]
    %v519 = vld [vmem:[%s1 + $0x28] sm:$0xff]
    %v520 = vld [vmem:[%s1 + $0x30] sm:$0xff]
    %v521 = vld [vmem:[%s1 + $0x38] sm:$0xff]
    %v522 = vld [vmem:[%s1 + $0x40] sm:$0xff]
    %v523 = vld [vmem:[%s1 + $0x48] sm:$0xff]
    %v524 = vld [vmem:[%s1 + $0x50] sm:$0xff]
    %v525 = vld [vmem:[%s1 + $0x58] sm:$0xff]
    %v526 = vld [vmem:[%s1 + $0x60] sm:$0xff]
    %v527 = vld [vmem:[%s1 + $0x68] sm:$0xff]
    %v528 = vld [vmem:[%s1 + $0x70] sm:$0xff]
    %v529 = vld [vmem:[%s1 + $0x78] sm:$0xff]
    %v530 = vld [vmem:[%s1 + $0x80] sm:$0xff]
    %v531 = vld [vmem:[%s1 + $0x88] sm:$0xff]
    %v532 = vld [vmem:[%s1 + $0x90] sm:$0xff]
    %v533 = vld [vmem:[%s1 + $0x98] sm:$0xff]
    %v534 = vld [vmem:[%s1 + $0xa0] sm:$0xff]
    %v535 = vld [vmem:[%s1 + $0xa8] sm:$0xff]
    %v536 = vld [vmem:[%s1 + $0xb0] sm:$0xff]
    %v537 = vld [vmem:[%s1 + $0xb8] sm:$0xff]
    %v538 = vld [vmem:[%s1 + $0xc0] sm:$0xff]
    %v539 = vld [vmem:[%s1 + $0xc8] sm:$0xff]
    %v540 = vld [vmem:[%s1 + $0xd0] sm:$0xff]
    %v541 = vld [vmem:[%s1 + $0xd8] sm:$0xff]
    %v542 = vld [vmem:[%s1 + $0xe0] sm:$0xff]
    %v543 = vld [vmem:[%s1 + $0xe8] sm:$0xff]
    %v544 = vld [vmem:[%s1 + $0xf0] sm:$0xff]
    %v545 = vld [vmem:[%s1 + $0xf8] sm:$0xff]
    %v546 = vld [vmem:[%s1 + $0x100] sm:$0xff]
    %v547 = vld [vmem:[%s1 + $0x108] sm:$0xff]
    %v548 = vld [vmem:[%s1 + $0x110] sm:$0xff]
    %v549 = vld [vmem:[%s1 + $0x118] sm:$0xff]
    %v550 = vld [vmem:[%s1 + $0x120] sm:$0xff]
    %v551 = vld [vmem:[%s1 + $0x128] sm:$0xff]
    %v552 = vld [vmem:[%s1 + $0x130] sm:$0xff]
    %v553 = vld [vmem:[%s1 + $0x138] sm:$0xff]
    %v554 = vld [vmem:[%s1 + $0x140] sm:$0xff]
    %v555 = vld [vmem:[%s1 + $0x148] sm:$0xff]
    %v556 = vld [vmem:[%s1 + $0x150] sm:$0xff]
    %v557 = vld [vmem:[%s1 + $0x158] sm:$0xff]
    %v558 = vld [vmem:[%s1 + $0x160] sm:$0xff]
    %v559 = vld [vmem:[%s1 + $0x168] sm:$0xff]
    %v560 = vld [vmem:[%s1 + $0x170] sm:$0xff]
    %v561 = vld [vmem:[%s1 + $0x178] sm:$0xff]
    %v562 = vld [vmem:[%s1 + $0x180] sm:$0xff]
    %v563 = vld [vmem:[%s1 + $0x188] sm:$0xff]
    %v564 = vld [vmem:[%s1 + $0x190] sm:$0xff]
    %v565 = vld [vmem:[%s1 + $0x198] sm:$0xff]
    %v566 = vld [vmem:[%s1 + $0x1a0] sm:$0xff]
    %v567 = vld [vmem:[%s1 + $0x1a8] sm:$0xff]
    %v568 = vld [vmem:[%s1 + $0x1b0] sm:$0xff]
    %v569 = vld [vmem:[%s1 + $0x1b8] sm:$0xff]
    %v570 = vld [vmem:[%s1 + $0x1c0] sm:$0xff]
    %v571 = vld [vmem:[%s1 + $0x1c8] sm:$0xff]
    %v572 = vld [vmem:[%s1 + $0x1d0] sm:$0xff]
    %v573 = vld [vmem:[%s1 + $0x1d8] sm:$0xff]
    %v574 = vld [vmem:[%s1 + $0x1e0] sm:$0xff]
    %v575 = vld [vmem:[%s1 + $0x1e8] sm:$0xff]
    %v576 = vld [vmem:[%s1 + $0x1f0] sm:$0xff]
    %v577 = vld [vmem:[%s1 + $0x1f8] sm:$0xff]
    %v578 = vld [vmem:[%s1 + $0x200] sm:$0xff]
    %v579 = vld [vmem:[%s1 + $0x208] sm:$0xff]
    %v580 = vld [vmem:[%s1 + $0x210] sm:$0xff]
    %v581 = vld [vmem:[%s1 + $0x218] sm:$0xff]
    %v582 = vld [vmem:[%s1 + $0x220] sm:$0xff]
    %v583 = vld [vmem:[%s1 + $0x228] sm:$0xff]
    %v584 = vld [vmem:[%s1 + $0x230] sm:$0xff]
    %v585 = vld [vmem:[%s1 + $0x238] sm:$0xff]
    %v586 = vld [vmem:[%s1 + $0x240] sm:$0xff]
    %v587 = vld [vmem:[%s1 + $0x248] sm:$0xff]
    %v588 = vld [vmem:[%s1 + $0x250] sm:$0xff]
    %v589 = vld [vmem:[%s1 + $0x258] sm:$0xff]
    %v590 = vld [vmem:[%s1 + $0x260] sm:$0xff]
    %v591 = vld [vmem:[%s1 + $0x268] sm:$0xff]
    %v592 = vld [vmem:[%s1 + $0x270] sm:$0xff]
    %v593 = vld [vmem:[%s1 + $0x278] sm:$0xff]
    %v594 = vld [vmem:[%s1 + $0x280] sm:$0xff]
    %v595 = vld [vmem:[%s1 + $0x288] sm:$0xff]
    %v596 = vld [vmem:[%s1 + $0x290] sm:$0xff]
    %v597 = vld [vmem:[%s1 + $0x298] sm:$0xff]
    %v598 = vld [vmem:[%s1 + $0x2a0] sm:$0xff]
    %v599 = vld [vmem:[%s1 + $0x2a8] sm:$0xff]
    %v600 = vld [vmem:[%s1 + $0x2b0] sm:$0xff]
    %v601 = vld [vmem:[%s1 + $0x2b8] sm:$0xff]
    %v602 = vld [vmem:[%s1 + $0x2c0] sm:$0xff]
    %v603 = vld [vmem:[%s1 + $0x2c8] sm:$0xff]
    %v604 = vld [vmem:[%s1 + $0x2d0] sm:$0xff]
    %v605 = vld [vmem:[%s1 + $0x2d8] sm:$0xff]
    %v606 = vld [vmem:[%s1 + $0x2e0] sm:$0xff]
    %v607 = vld [vmem:[%s1 + $0x2e8] sm:$0xff]
    %v608 = vld [vmem:[%s1 + $0x2f0] sm:$0xff]
    %v609 = vld [vmem:[%s1 + $0x2f8] sm:$0xff]
    %v610 = vld [vmem:[%s2] sm:$0x1]
    %v612 = vlaneseq
    %v613 = vshrl.u32 %v612, 7
    %v614 = vsub.s32 0, %v613
    %v615 = vrot.slane %v610, %v614
    %617 = vmatprep.subr.mxu0 0.0
    %v618 = vand.u32 %v514, 4294901760
    %619 = vmatpush1.msra.mxu0 %v618
    %620 = vmatprep.subr.mxu0 0.0
    %v621 = vand.u32 %v515, 4294901760
    %622 = vmatpush1.msra.mxu0 %v621
    %623 = vmatprep.subr.mxu0 0.0
    %v624 = vand.u32 %v516, 4294901760
    %625 = vmatpush1.msra.mxu0 %v624
    %626 = vmatprep.subr.mxu0 0.0
    %v627 = vand.u32 %v517, 4294901760
    %628 = vmatpush1.msra.mxu0 %v627
    %629 = vmatprep.subr.mxu0 0.0
    %v630 = vand.u32 %v518, 4294901760
    %631 = vmatpush1.msra.mxu0 %v630
    %632 = vmatprep.subr.mxu0 0.0
    %v633 = vand.u32 %v519, 4294901760
    %634 = vmatpush1.msra.mxu0 %v633
    %635 = vmatprep.subr.mxu0 0.0
    %v636 = vand.u32 %v520, 4294901760
    %637 = vmatpush1.msra.mxu0 %v636
    %638 = vmatprep.subr.mxu0 0.0
    %v639 = vand.u32 %v521, 4294901760
    %640 = vmatpush1.msra.mxu0 %v639
    %641 = vmatprep.subr.mxu0 0.0
    %v642 = vand.u32 %v522, 4294901760
    %643 = vmatpush1.msra.mxu0 %v642
    %644 = vmatprep.subr.mxu0 0.0
    %v645 = vand.u32 %v523, 4294901760
    %646 = vmatpush1.msra.mxu0 %v645
    %647 = vmatprep.subr.mxu0 0.0
    %v648 = vand.u32 %v524, 4294901760
    %649 = vmatpush1.msra.mxu0 %v648
    %650 = vmatprep.subr.mxu0 0.0
    %v651 = vand.u32 %v525, 4294901760
    %652 = vmatpush1.msra.mxu0 %v651
    %653 = vmatprep.subr.mxu0 0.0
    %v654 = vand.u32 %v526, 4294901760
    %655 = vmatpush1.msra.mxu0 %v654
    %656 = vmatprep.subr.mxu0 0.0
    %v657 = vand.u32 %v527, 4294901760
    %658 = vmatpush1.msra.mxu0 %v657
    %659 = vmatprep.subr.mxu0 0.0
    %v660 = vand.u32 %v528, 4294901760
    %661 = vmatpush1.msra.mxu0 %v660
    %662 = vmatprep.subr.mxu0 0.0
    %v663 = vand.u32 %v529, 4294901760
    %664 = vmatpush1.msra.mxu0 %v663
    %665 = vmatprep.subr.mxu0 0.0
    %v666 = vand.u32 %v530, 4294901760
    %667 = vmatpush1.msra.mxu0 %v666
    %668 = vmatprep.subr.mxu0 0.0
    %v669 = vand.u32 %v531, 4294901760
    %670 = vmatpush1.msra.mxu0 %v669
    %671 = vmatprep.subr.mxu0 0.0
    %v672 = vand.u32 %v532, 4294901760
    %673 = vmatpush1.msra.mxu0 %v672
    %674 = vmatprep.subr.mxu0 0.0
    %v675 = vand.u32 %v533, 4294901760
    %676 = vmatpush1.msra.mxu0 %v675
    %677 = vmatprep.subr.mxu0 0.0
    %v678 = vand.u32 %v534, 4294901760
    %679 = vmatpush1.msra.mxu0 %v678
    %680 = vmatprep.subr.mxu0 0.0
    %v681 = vand.u32 %v535, 4294901760
    %682 = vmatpush1.msra.mxu0 %v681
    %683 = vmatprep.subr.mxu0 0.0
    %v684 = vand.u32 %v536, 4294901760
    %685 = vmatpush1.msra.mxu0 %v684
    %686 = vmatprep.subr.mxu0 0.0
    %v687 = vand.u32 %v537, 4294901760
    %688 = vmatpush1.msra.mxu0 %v687
    %689 = vmatprep.subr.mxu0 0.0
    %v690 = vand.u32 %v538, 4294901760
    %691 = vmatpush1.msra.mxu0 %v690
    %692 = vmatprep.subr.mxu0 0.0
    %v693 = vand.u32 %v539, 4294901760
    %694 = vmatpush1.msra.mxu0 %v693
    %695 = vmatprep.subr.mxu0 0.0
    %v696 = vand.u32 %v540, 4294901760
    %697 = vmatpush1.msra.mxu0 %v696
    %698 = vmatprep.subr.mxu0 0.0
    %v699 = vand.u32 %v541, 4294901760
    %700 = vmatpush1.msra.mxu0 %v699
    %701 = vmatprep.subr.mxu0 0.0
    %v702 = vand.u32 %v542, 4294901760
    %703 = vmatpush1.msra.mxu0 %v702
    %704 = vmatprep.subr.mxu0 0.0
    %v705 = vand.u32 %v543, 4294901760
    %706 = vmatpush1.msra.mxu0 %v705
    %707 = vmatprep.subr.mxu0 0.0
    %v708 = vand.u32 %v544, 4294901760
    %709 = vmatpush1.msra.mxu0 %v708
    %710 = vmatprep.subr.mxu0 0.0
    %v711 = vand.u32 %v545, 4294901760
    %712 = vmatpush1.msra.mxu0 %v711
    %v713 = vand.u32 %v509, 4294901760
    %v714 = vsub.f32 %v509, %v713
    %v715 = vand.u32 %v714, 4294901760
    %v716 = vsub.f32 %v714, %v715
    %v717 = vand.u32 %v716, 4294901760
    %718 = vmatprep.mubr.f32.mxu0 %v717
    %v719 = vand.u32 %v508, 4294901760
    %v720 = vsub.f32 %v508, %v719
    %v721 = vand.u32 %v720, 4294901760
    %v722 = vsub.f32 %v720, %v721
    %v723 = vand.u32 %v722, 4294901760
    %724 = vmatmul.mubr.f32.gmra.mrb[0].mxu0 %v723
    %v725 = vpop.f32.mrb[0].mxu0
    %v726 = vadd.f32 %v615, %v725
    %v727 = vpop.f32.mrb[0].mxu0
    %728 = vdwg.mxu0
    %729 = vmatprep.subr.mxu0 0.0
    %v730 = vand.u32 %v514, 4294901760
    %v731 = vsub.f32 %v514, %v730
    %v732 = vand.u32 %v731, 4294901760
    %v733 = vsub.f32 %v731, %v732
    %v734 = vand.u32 %v733, 4294901760
    %735 = vmatpush1.msra.mxu0 %v734
    %736 = vmatprep.subr.mxu0 0.0
    %v737 = vand.u32 %v515, 4294901760
    %v738 = vsub.f32 %v515, %v737
    %v739 = vand.u32 %v738, 4294901760
    %v740 = vsub.f32 %v738, %v739
    %v741 = vand.u32 %v740, 4294901760
    %742 = vmatpush1.msra.mxu0 %v741
    %743 = vmatprep.subr.mxu0 0.0
    %v744 = vand.u32 %v516, 4294901760
    %v745 = vsub.f32 %v516, %v744
    %v746 = vand.u32 %v745, 4294901760
    %v747 = vsub.f32 %v745, %v746
    %v748 = vand.u32 %v747, 4294901760
    %749 = vmatpush1.msra.mxu0 %v748
    %750 = vmatprep.subr.mxu0 0.0
    %v751 = vand.u32 %v517, 4294901760
    %v752 = vsub.f32 %v517, %v751
    %v753 = vand.u32 %v752, 4294901760
    %v754 = vsub.f32 %v752, %v753
    %v755 = vand.u32 %v754, 4294901760
    %756 = vmatpush1.msra.mxu0 %v755
    %757 = vmatprep.subr.mxu0 0.0
    %v758 = vand.u32 %v518, 4294901760
    %v759 = vsub.f32 %v518, %v758
    %v760 = vand.u32 %v759, 4294901760
    %v761 = vsub.f32 %v759, %v760
    %v762 = vand.u32 %v761, 4294901760
    %763 = vmatpush1.msra.mxu0 %v762
    %764 = vmatprep.subr.mxu0 0.0
    %v765 = vand.u32 %v519, 4294901760
    %v766 = vsub.f32 %v519, %v765
    %v767 = vand.u32 %v766, 4294901760
    %v768 = vsub.f32 %v766, %v767
    %v769 = vand.u32 %v768, 4294901760
    %770 = vmatpush1.msra.mxu0 %v769
    %771 = vmatprep.subr.mxu0 0.0
    %v772 = vand.u32 %v520, 4294901760
    %v773 = vsub.f32 %v520, %v772
    %v774 = vand.u32 %v773, 4294901760
    %v775 = vsub.f32 %v773, %v774
    %v776 = vand.u32 %v775, 4294901760
    %777 = vmatpush1.msra.mxu0 %v776
    %778 = vmatprep.subr.mxu0 0.0
    %v779 = vand.u32 %v521, 4294901760
    %v780 = vsub.f32 %v521, %v779
    %v781 = vand.u32 %v780, 4294901760
    %v782 = vsub.f32 %v780, %v781
    %v783 = vand.u32 %v782, 4294901760
    %784 = vmatpush1.msra.mxu0 %v783
    %785 = vmatprep.subr.mxu0 0.0
    %v786 = vand.u32 %v522, 4294901760
    %v787 = vsub.f32 %v522, %v786
    %v788 = vand.u32 %v787, 4294901760
    %v789 = vsub.f32 %v787, %v788
    %v790 = vand.u32 %v789, 4294901760
    %791 = vmatpush1.msra.mxu0 %v790
    %792 = vmatprep.subr.mxu0 0.0
    %v793 = vand.u32 %v523, 4294901760
    %v794 = vsub.f32 %v523, %v793
    %v795 = vand.u32 %v794, 4294901760
    %v796 = vsub.f32 %v794, %v795
    %v797 = vand.u32 %v796, 4294901760
    %798 = vmatpush1.msra.mxu0 %v797
    %799 = vmatprep.subr.mxu0 0.0
    %v800 = vand.u32 %v524, 4294901760
    %v801 = vsub.f32 %v524, %v800
    %v802 = vand.u32 %v801, 4294901760
    %v803 = vsub.f32 %v801, %v802
    %v804 = vand.u32 %v803, 4294901760
    %805 = vmatpush1.msra.mxu0 %v804
    %806 = vmatprep.subr.mxu0 0.0
    %v807 = vand.u32 %v525, 4294901760
    %v808 = vsub.f32 %v525, %v807
    %v809 = vand.u32 %v808, 4294901760
    %v810 = vsub.f32 %v808, %v809
    %v811 = vand.u32 %v810, 4294901760
    %812 = vmatpush1.msra.mxu0 %v811
    %813 = vmatprep.subr.mxu0 0.0
    %v814 = vand.u32 %v526, 4294901760
    %v815 = vsub.f32 %v526, %v814
    %v816 = vand.u32 %v815, 4294901760
    %v817 = vsub.f32 %v815, %v816
    %v818 = vand.u32 %v817, 4294901760
    %819 = vmatpush1.msra.mxu0 %v818
    %820 = vmatprep.subr.mxu0 0.0
    %v821 = vand.u32 %v527, 4294901760
    %v822 = vsub.f32 %v527, %v821
    %v823 = vand.u32 %v822, 4294901760
    %v824 = vsub.f32 %v822, %v823
    %v825 = vand.u32 %v824, 4294901760
    %826 = vmatpush1.msra.mxu0 %v825
    %827 = vmatprep.subr.mxu0 0.0
    %v828 = vand.u32 %v528, 4294901760
    %v829 = vsub.f32 %v528, %v828
    %v830 = vand.u32 %v829, 4294901760
    %v831 = vsub.f32 %v829, %v830
    %v832 = vand.u32 %v831, 4294901760
    %833 = vmatpush1.msra.mxu0 %v832
    %834 = vmatprep.subr.mxu0 0.0
    %v835 = vand.u32 %v529, 4294901760
    %v836 = vsub.f32 %v529, %v835
    %v837 = vand.u32 %v836, 4294901760
    %v838 = vsub.f32 %v836, %v837
    %v839 = vand.u32 %v838, 4294901760
    %840 = vmatpush1.msra.mxu0 %v839
    %841 = vmatprep.subr.mxu0 0.0
    %v842 = vand.u32 %v530, 4294901760
    %v843 = vsub.f32 %v530, %v842
    %v844 = vand.u32 %v843, 4294901760
    %v845 = vsub.f32 %v843, %v844
    %v846 = vand.u32 %v845, 4294901760
    %847 = vmatpush1.msra.mxu0 %v846
    %848 = vmatprep.subr.mxu0 0.0
    %v849 = vand.u32 %v531, 4294901760
    %v850 = vsub.f32 %v531, %v849
    %v851 = vand.u32 %v850, 4294901760
    %v852 = vsub.f32 %v850, %v851
    %v853 = vand.u32 %v852, 4294901760
    %854 = vmatpush1.msra.mxu0 %v853
    %855 = vmatprep.subr.mxu0 0.0
    %v856 = vand.u32 %v532, 4294901760
    %v857 = vsub.f32 %v532, %v856
    %v858 = vand.u32 %v857, 4294901760
    %v859 = vsub.f32 %v857, %v858
    %v860 = vand.u32 %v859, 4294901760
    %861 = vmatpush1.msra.mxu0 %v860
    %862 = vmatprep.subr.mxu0 0.0
    %v863 = vand.u32 %v533, 4294901760
    %v864 = vsub.f32 %v533, %v863
    %v865 = vand.u32 %v864, 4294901760
    %v866 = vsub.f32 %v864, %v865
    %v867 = vand.u32 %v866, 4294901760
    %868 = vmatpush1.msra.mxu0 %v867
    %869 = vmatprep.subr.mxu0 0.0
    %v870 = vand.u32 %v534, 4294901760
    %v871 = vsub.f32 %v534, %v870
    %v872 = vand.u32 %v871, 4294901760
    %v873 = vsub.f32 %v871, %v872
    %v874 = vand.u32 %v873, 4294901760
    %875 = vmatpush1.msra.mxu0 %v874
    %876 = vmatprep.subr.mxu0 0.0
    %v877 = vand.u32 %v535, 4294901760
    %v878 = vsub.f32 %v535, %v877
    %v879 = vand.u32 %v878, 4294901760
    %v880 = vsub.f32 %v878, %v879
    %v881 = vand.u32 %v880, 4294901760
    %882 = vmatpush1.msra.mxu0 %v881
    %883 = vmatprep.subr.mxu0 0.0
    %v884 = vand.u32 %v536, 4294901760
    %v885 = vsub.f32 %v536, %v884
    %v886 = vand.u32 %v885, 4294901760
    %v887 = vsub.f32 %v885, %v886
    %v888 = vand.u32 %v887, 4294901760
    %889 = vmatpush1.msra.mxu0 %v888
    %890 = vmatprep.subr.mxu0 0.0
    %v891 = vand.u32 %v537, 4294901760
    %v892 = vsub.f32 %v537, %v891
    %v893 = vand.u32 %v892, 4294901760
    %v894 = vsub.f32 %v892, %v893
    %v895 = vand.u32 %v894, 4294901760
    %896 = vmatpush1.msra.mxu0 %v895
    %897 = vmatprep.subr.mxu0 0.0
    %v898 = vand.u32 %v538, 4294901760
    %v899 = vsub.f32 %v538, %v898
    %v900 = vand.u32 %v899, 4294901760
    %v901 = vsub.f32 %v899, %v900
    %v902 = vand.u32 %v901, 4294901760
    %903 = vmatpush1.msra.mxu0 %v902
    %904 = vmatprep.subr.mxu0 0.0
    %v905 = vand.u32 %v539, 4294901760
    %v906 = vsub.f32 %v539, %v905
    %v907 = vand.u32 %v906, 4294901760
    %v908 = vsub.f32 %v906, %v907
    %v909 = vand.u32 %v908, 4294901760
    %910 = vmatpush1.msra.mxu0 %v909
    %911 = vmatprep.subr.mxu0 0.0
    %v912 = vand.u32 %v540, 4294901760
    %v913 = vsub.f32 %v540, %v912
    %v914 = vand.u32 %v913, 4294901760
    %v915 = vsub.f32 %v913, %v914
    %v916 = vand.u32 %v915, 4294901760
    %917 = vmatpush1.msra.mxu0 %v916
    %918 = vmatprep.subr.mxu0 0.0
    %v919 = vand.u32 %v541, 4294901760
    %v920 = vsub.f32 %v541, %v919
    %v921 = vand.u32 %v920, 4294901760
    %v922 = vsub.f32 %v920, %v921
    %v923 = vand.u32 %v922, 4294901760
    %924 = vmatpush1.msra.mxu0 %v923
    %925 = vmatprep.subr.mxu0 0.0
    %v926 = vand.u32 %v542, 4294901760
    %v927 = vsub.f32 %v542, %v926
    %v928 = vand.u32 %v927, 4294901760
    %v929 = vsub.f32 %v927, %v928
    %v930 = vand.u32 %v929, 4294901760
    %931 = vmatpush1.msra.mxu0 %v930
    %932 = vmatprep.subr.mxu0 0.0
    %v933 = vand.u32 %v543, 4294901760
    %v934 = vsub.f32 %v543, %v933
    %v935 = vand.u32 %v934, 4294901760
    %v936 = vsub.f32 %v934, %v935
    %v937 = vand.u32 %v936, 4294901760
    %938 = vmatpush1.msra.mxu0 %v937
    %939 = vmatprep.subr.mxu0 0.0
    %v940 = vand.u32 %v544, 4294901760
    %v941 = vsub.f32 %v544, %v940
    %v942 = vand.u32 %v941, 4294901760
    %v943 = vsub.f32 %v941, %v942
    %v944 = vand.u32 %v943, 4294901760
    %945 = vmatpush1.msra.mxu0 %v944
    %946 = vmatprep.subr.mxu0 0.0
    %v947 = vand.u32 %v545, 4294901760
    %v948 = vsub.f32 %v545, %v947
    %v949 = vand.u32 %v948, 4294901760
    %v950 = vsub.f32 %v948, %v949
    %v951 = vand.u32 %v950, 4294901760
    %952 = vmatpush1.msra.mxu0 %v951
    %v953 = vand.u32 %v509, 4294901760
    %954 = vmatprep.mubr.f32.mxu0 %v953
    %v955 = vand.u32 %v508, 4294901760
    %956 = vmatmul.mubr.f32.gmra.mrb[0].mxu0 %v955
    %v957 = vpop.f32.mrb[0].mxu0
    %v958 = vadd.f32 %v726, %v957
    %v959 = vpop.f32.mrb[0].mxu0
    %960 = vdwg.mxu0
    %961 = vmatprep.subr.mxu0 0.0
    %v962 = vand.u32 %v514, 4294901760
    %v963 = vsub.f32 %v514, %v962
    %964 = vmatpush1.msra.mxu0 %v963
    %965 = vmatprep.subr.mxu0 0.0
    %v966 = vand.u32 %v515, 4294901760
    %v967 = vsub.f32 %v515, %v966
    %968 = vmatpush1.msra.mxu0 %v967
    %969 = vmatprep.subr.mxu0 0.0
    %v970 = vand.u32 %v516, 4294901760
    %v971 = vsub.f32 %v516, %v970
    %972 = vmatpush1.msra.mxu0 %v971
    %973 = vmatprep.subr.mxu0 0.0
    %v974 = vand.u32 %v517, 4294901760
    %v975 = vsub.f32 %v517, %v974
    %976 = vmatpush1.msra.mxu0 %v975
    %977 = vmatprep.subr.mxu0 0.0
    %v978 = vand.u32 %v518, 4294901760
    %v979 = vsub.f32 %v518, %v978
    %980 = vmatpush1.msra.mxu0 %v979
    %981 = vmatprep.subr.mxu0 0.0
    %v982 = vand.u32 %v519, 4294901760
    %v983 = vsub.f32 %v519, %v982
    %984 = vmatpush1.msra.mxu0 %v983
    %985 = vmatprep.subr.mxu0 0.0
    %v986 = vand.u32 %v520, 4294901760
    %v987 = vsub.f32 %v520, %v986
    %988 = vmatpush1.msra.mxu0 %v987
    %989 = vmatprep.subr.mxu0 0.0
    %v990 = vand.u32 %v521, 4294901760
    %v991 = vsub.f32 %v521, %v990
    %992 = vmatpush1.msra.mxu0 %v991
    %993 = vmatprep.subr.mxu0 0.0
    %v994 = vand.u32 %v522, 4294901760
    %v995 = vsub.f32 %v522, %v994
    %996 = vmatpush1.msra.mxu0 %v995
    %997 = vmatprep.subr.mxu0 0.0
    %v998 = vand.u32 %v523, 4294901760
    %v999 = vsub.f32 %v523, %v998
    %1000 = vmatpush1.msra.mxu0 %v999
    %1001 = vmatprep.subr.mxu0 0.0
    %v1002 = vand.u32 %v524, 4294901760
    %v1003 = vsub.f32 %v524, %v1002
    %1004 = vmatpush1.msra.mxu0 %v1003
    %1005 = vmatprep.subr.mxu0 0.0
    %v1006 = vand.u32 %v525, 4294901760
    %v1007 = vsub.f32 %v525, %v1006
    %1008 = vmatpush1.msra.mxu0 %v1007
    %1009 = vmatprep.subr.mxu0 0.0
    %v1010 = vand.u32 %v526, 4294901760
    %v1011 = vsub.f32 %v526, %v1010
    %1012 = vmatpush1.msra.mxu0 %v1011
    %1013 = vmatprep.subr.mxu0 0.0
    %v1014 = vand.u32 %v527, 4294901760
    %v1015 = vsub.f32 %v527, %v1014
    %1016 = vmatpush1.msra.mxu0 %v1015
    %1017 = vmatprep.subr.mxu0 0.0
    %v1018 = vand.u32 %v528, 4294901760
    %v1019 = vsub.f32 %v528, %v1018
    %1020 = vmatpush1.msra.mxu0 %v1019
    %1021 = vmatprep.subr.mxu0 0.0
    %v1022 = vand.u32 %v529, 4294901760
    %v1023 = vsub.f32 %v529, %v1022
    %1024 = vmatpush1.msra.mxu0 %v1023
    %1025 = vmatprep.subr.mxu0 0.0
    %v1026 = vand.u32 %v530, 4294901760
    %v1027 = vsub.f32 %v530, %v1026
    %1028 = vmatpush1.msra.mxu0 %v1027
    %1029 = vmatprep.subr.mxu0 0.0
    %v1030 = vand.u32 %v531, 4294901760
    %v1031 = vsub.f32 %v531, %v1030
    %1032 = vmatpush1.msra.mxu0 %v1031
    %1033 = vmatprep.subr.mxu0 0.0
    %v1034 = vand.u32 %v532, 4294901760
    %v1035 = vsub.f32 %v532, %v1034
    %1036 = vmatpush1.msra.mxu0 %v1035
    %1037 = vmatprep.subr.mxu0 0.0
    %v1038 = vand.u32 %v533, 4294901760
    %v1039 = vsub.f32 %v533, %v1038
    %1040 = vmatpush1.msra.mxu0 %v1039
    %1041 = vmatprep.subr.mxu0 0.0
    %v1042 = vand.u32 %v534, 4294901760
    %v1043 = vsub.f32 %v534, %v1042
    %1044 = vmatpush1.msra.mxu0 %v1043
    %1045 = vmatprep.subr.mxu0 0.0
    %v1046 = vand.u32 %v535, 4294901760
    %v1047 = vsub.f32 %v535, %v1046
    %1048 = vmatpush1.msra.mxu0 %v1047
    %1049 = vmatprep.subr.mxu0 0.0
    %v1050 = vand.u32 %v536, 4294901760
    %v1051 = vsub.f32 %v536, %v1050
    %1052 = vmatpush1.msra.mxu0 %v1051
    %1053 = vmatprep.subr.mxu0 0.0
    %v1054 = vand.u32 %v537, 4294901760
    %v1055 = vsub.f32 %v537, %v1054
    %1056 = vmatpush1.msra.mxu0 %v1055
    %1057 = vmatprep.subr.mxu0 0.0
    %v1058 = vand.u32 %v538, 4294901760
    %v1059 = vsub.f32 %v538, %v1058
    %1060 = vmatpush1.msra.mxu0 %v1059
    %1061 = vmatprep.subr.mxu0 0.0
    %v1062 = vand.u32 %v539, 4294901760
    %v1063 = vsub.f32 %v539, %v1062
    %1064 = vmatpush1.msra.mxu0 %v1063
    %1065 = vmatprep.subr.mxu0 0.0
    %v1066 = vand.u32 %v540, 4294901760
    %v1067 = vsub.f32 %v540, %v1066
    %1068 = vmatpush1.msra.mxu0 %v1067
    %1069 = vmatprep.subr.mxu0 0.0
    %v1070 = vand.u32 %v541, 4294901760
    %v1071 = vsub.f32 %v541, %v1070
    %1072 = vmatpush1.msra.mxu0 %v1071
    %1073 = vmatprep.subr.mxu0 0.0
    %v1074 = vand.u32 %v542, 4294901760
    %v1075 = vsub.f32 %v542, %v1074
    %1076 = vmatpush1.msra.mxu0 %v1075
    %1077 = vmatprep.subr.mxu0 0.0
    %v1078 = vand.u32 %v543, 4294901760
    %v1079 = vsub.f32 %v543, %v1078
    %1080 = vmatpush1.msra.mxu0 %v1079
    %1081 = vmatprep.subr.mxu0 0.0
    %v1082 = vand.u32 %v544, 4294901760
    %v1083 = vsub.f32 %v544, %v1082
    %1084 = vmatpush1.msra.mxu0 %v1083
    %1085 = vmatprep.subr.mxu0 0.0
    %v1086 = vand.u32 %v545, 4294901760
    %v1087 = vsub.f32 %v545, %v1086
    %1088 = vmatpush1.msra.mxu0 %v1087
    %v1089 = vand.u32 %v509, 4294901760
    %v1090 = vsub.f32 %v509, %v1089
    %1091 = vmatprep.mubr.f32.mxu0 %v1090
    %v1092 = vand.u32 %v508, 4294901760
    %v1093 = vsub.f32 %v508, %v1092
    %1094 = vmatmul.mubr.f32.gmra.mrb[0].mxu0 %v1093
    %v1095 = vpop.f32.mrb[0].mxu0
    %v1096 = vadd.f32 %v958, %v1095
    %v1097 = vpop.f32.mrb[0].mxu0
    %1098 = vdwg.mxu0
    %1099 = vmatprep.subr.mxu0 0.0
    %v1100 = vand.u32 %v514, 4294901760
    %1101 = vmatpush1.msra.mxu0 %v1100
    %1102 = vmatprep.subr.mxu0 0.0
    %v1103 = vand.u32 %v515, 4294901760
    %1104 = vmatpush1.msra.mxu0 %v1103
    %1105 = vmatprep.subr.mxu0 0.0
    %v1106 = vand.u32 %v516, 4294901760
    %1107 = vmatpush1.msra.mxu0 %v1106
    %1108 = vmatprep.subr.mxu0 0.0
    %v1109 = vand.u32 %v517, 4294901760
    %1110 = vmatpush1.msra.mxu0 %v1109
    %1111 = vmatprep.subr.mxu0 0.0
    %v1112 = vand.u32 %v518, 4294901760
    %1113 = vmatpush1.msra.mxu0 %v1112
    %1114 = vmatprep.subr.mxu0 0.0
    %v1115 = vand.u32 %v519, 4294901760
    %1116 = vmatpush1.msra.mxu0 %v1115
    %1117 = vmatprep.subr.mxu0 0.0
    %v1118 = vand.u32 %v520, 4294901760
    %1119 = vmatpush1.msra.mxu0 %v1118
    %1120 = vmatprep.subr.mxu0 0.0
    %v1121 = vand.u32 %v521, 4294901760
    %1122 = vmatpush1.msra.mxu0 %v1121
    %1123 = vmatprep.subr.mxu0 0.0
    %v1124 = vand.u32 %v522, 4294901760
    %1125 = vmatpush1.msra.mxu0 %v1124
    %1126 = vmatprep.subr.mxu0 0.0
    %v1127 = vand.u32 %v523, 4294901760
    %1128 = vmatpush1.msra.mxu0 %v1127
    %1129 = vmatprep.subr.mxu0 0.0
    %v1130 = vand.u32 %v524, 4294901760
    %1131 = vmatpush1.msra.mxu0 %v1130
    %1132 = vmatprep.subr.mxu0 0.0
    %v1133 = vand.u32 %v525, 4294901760
    %1134 = vmatpush1.msra.mxu0 %v1133
    %1135 = vmatprep.subr.mxu0 0.0
    %v1136 = vand.u32 %v526, 4294901760
    %1137 = vmatpush1.msra.mxu0 %v1136
    %1138 = vmatprep.subr.mxu0 0.0
    %v1139 = vand.u32 %v527, 4294901760
    %1140 = vmatpush1.msra.mxu0 %v1139
    %1141 = vmatprep.subr.mxu0 0.0
    %v1142 = vand.u32 %v528, 4294901760
    %1143 = vmatpush1.msra.mxu0 %v1142
    %1144 = vmatprep.subr.mxu0 0.0
    %v1145 = vand.u32 %v529, 4294901760
    %1146 = vmatpush1.msra.mxu0 %v1145
    %1147 = vmatprep.subr.mxu0 0.0
    %v1148 = vand.u32 %v530, 4294901760
    %1149 = vmatpush1.msra.mxu0 %v1148
    %1150 = vmatprep.subr.mxu0 0.0
    %v1151 = vand.u32 %v531, 4294901760
    %1152 = vmatpush1.msra.mxu0 %v1151
    %1153 = vmatprep.subr.mxu0 0.0
    %v1154 = vand.u32 %v532, 4294901760
    %1155 = vmatpush1.msra.mxu0 %v1154
    %1156 = vmatprep.subr.mxu0 0.0
    %v1157 = vand.u32 %v533, 4294901760
    %1158 = vmatpush1.msra.mxu0 %v1157
    %1159 = vmatprep.subr.mxu0 0.0
    %v1160 = vand.u32 %v534, 4294901760
    %1161 = vmatpush1.msra.mxu0 %v1160
    %1162 = vmatprep.subr.mxu0 0.0
    %v1163 = vand.u32 %v535, 4294901760
    %1164 = vmatpush1.msra.mxu0 %v1163
    %1165 = vmatprep.subr.mxu0 0.0
    %v1166 = vand.u32 %v536, 4294901760
    %1167 = vmatpush1.msra.mxu0 %v1166
    %1168 = vmatprep.subr.mxu0 0.0
    %v1169 = vand.u32 %v537, 4294901760
    %1170 = vmatpush1.msra.mxu0 %v1169
    %1171 = vmatprep.subr.mxu0 0.0
    %v1172 = vand.u32 %v538, 4294901760
    %1173 = vmatpush1.msra.mxu0 %v1172
    %1174 = vmatprep.subr.mxu0 0.0
    %v1175 = vand.u32 %v539, 4294901760
    %1176 = vmatpush1.msra.mxu0 %v1175
    %1177 = vmatprep.subr.mxu0 0.0
    %v1178 = vand.u32 %v540, 4294901760
    %1179 = vmatpush1.msra.mxu0 %v1178
    %1180 = vmatprep.subr.mxu0 0.0
    %v1181 = vand.u32 %v541, 4294901760
    %1182 = vmatpush1.msra.mxu0 %v1181
    %1183 = vmatprep.subr.mxu0 0.0
    %v1184 = vand.u32 %v542, 4294901760
    %1185 = vmatpush1.msra.mxu0 %v1184
    %1186 = vmatprep.subr.mxu0 0.0
    %v1187 = vand.u32 %v543, 4294901760
    %1188 = vmatpush1.msra.mxu0 %v1187
    %1189 = vmatprep.subr.mxu0 0.0
    %v1190 = vand.u32 %v544, 4294901760
    %1191 = vmatpush1.msra.mxu0 %v1190
    %1192 = vmatprep.subr.mxu0 0.0
    %v1193 = vand.u32 %v545, 4294901760
    %1194 = vmatpush1.msra.mxu0 %v1193
    %v1195 = vand.u32 %v509, 4294901760
    %v1196 = vsub.f32 %v509, %v1195
    %v1197 = vand.u32 %v1196, 4294901760
    %1198 = vmatprep.mubr.f32.mxu0 %v1197
    %v1199 = vand.u32 %v508, 4294901760
    %v1200 = vsub.f32 %v508, %v1199
    %v1201 = vand.u32 %v1200, 4294901760
    %1202 = vmatmul.mubr.f32.gmra.mrb[0].mxu0 %v1201
    %v1203 = vpop.f32.mrb[0].mxu0
    %v1204 = vadd.f32 %v1096, %v1203
    %v1205 = vpop.f32.mrb[0].mxu0
    %1206 = vdwg.mxu0
    %1207 = vmatprep.subr.mxu0 0.0
    %v1208 = vand.u32 %v514, 4294901760
    %v1209 = vsub.f32 %v514, %v1208
    %v1210 = vand.u32 %v1209, 4294901760
    %1211 = vmatpush1.msra.mxu0 %v1210
    %1212 = vmatprep.subr.mxu0 0.0
    %v1213 = vand.u32 %v515, 4294901760
    %v1214 = vsub.f32 %v515, %v1213
    %v1215 = vand.u32 %v1214, 4294901760
    %1216 = vmatpush1.msra.mxu0 %v1215
    %1217 = vmatprep.subr.mxu0 0.0
    %v1218 = vand.u32 %v516, 4294901760
    %v1219 = vsub.f32 %v516, %v1218
    %v1220 = vand.u32 %v1219, 4294901760
    %1221 = vmatpush1.msra.mxu0 %v1220
    %1222 = vmatprep.subr.mxu0 0.0
    %v1223 = vand.u32 %v517, 4294901760
    %v1224 = vsub.f32 %v517, %v1223
    %v1225 = vand.u32 %v1224, 4294901760
    %1226 = vmatpush1.msra.mxu0 %v1225
    %1227 = vmatprep.subr.mxu0 0.0
    %v1228 = vand.u32 %v518, 4294901760
    %v1229 = vsub.f32 %v518, %v1228
    %v1230 = vand.u32 %v1229, 4294901760
    %1231 = vmatpush1.msra.mxu0 %v1230
    %1232 = vmatprep.subr.mxu0 0.0
    %v1233 = vand.u32 %v519, 4294901760
    %v1234 = vsub.f32 %v519, %v1233
    %v1235 = vand.u32 %v1234, 4294901760
    %1236 = vmatpush1.msra.mxu0 %v1235
    %1237 = vmatprep.subr.mxu0 0.0
    %v1238 = vand.u32 %v520, 4294901760
    %v1239 = vsub.f32 %v520, %v1238
    %v1240 = vand.u32 %v1239, 4294901760
    %1241 = vmatpush1.msra.mxu0 %v1240
    %1242 = vmatprep.subr.mxu0 0.0
    %v1243 = vand.u32 %v521, 4294901760
    %v1244 = vsub.f32 %v521, %v1243
    %v1245 = vand.u32 %v1244, 4294901760
    %1246 = vmatpush1.msra.mxu0 %v1245
    %1247 = vmatprep.subr.mxu0 0.0
    %v1248 = vand.u32 %v522, 4294901760
    %v1249 = vsub.f32 %v522, %v1248
    %v1250 = vand.u32 %v1249, 4294901760
    %1251 = vmatpush1.msra.mxu0 %v1250
    %1252 = vmatprep.subr.mxu0 0.0
    %v1253 = vand.u32 %v523, 4294901760
    %v1254 = vsub.f32 %v523, %v1253
    %v1255 = vand.u32 %v1254, 4294901760
    %1256 = vmatpush1.msra.mxu0 %v1255
    %1257 = vmatprep.subr.mxu0 0.0
    %v1258 = vand.u32 %v524, 4294901760
    %v1259 = vsub.f32 %v524, %v1258
    %v1260 = vand.u32 %v1259, 4294901760
    %1261 = vmatpush1.msra.mxu0 %v1260
    %1262 = vmatprep.subr.mxu0 0.0
    %v1263 = vand.u32 %v525, 4294901760
    %v1264 = vsub.f32 %v525, %v1263
    %v1265 = vand.u32 %v1264, 4294901760
    %1266 = vmatpush1.msra.mxu0 %v1265
    %1267 = vmatprep.subr.mxu0 0.0
    %v1268 = vand.u32 %v526, 4294901760
    %v1269 = vsub.f32 %v526, %v1268
    %v1270 = vand.u32 %v1269, 4294901760
    %1271 = vmatpush1.msra.mxu0 %v1270
    %1272 = vmatprep.subr.mxu0 0.0
    %v1273 = vand.u32 %v527, 4294901760
    %v1274 = vsub.f32 %v527, %v1273
    %v1275 = vand.u32 %v1274, 4294901760
    %1276 = vmatpush1.msra.mxu0 %v1275
    %1277 = vmatprep.subr.mxu0 0.0
    %v1278 = vand.u32 %v528, 4294901760
    %v1279 = vsub.f32 %v528, %v1278
    %v1280 = vand.u32 %v1279, 4294901760
    %1281 = vmatpush1.msra.mxu0 %v1280
    %1282 = vmatprep.subr.mxu0 0.0
    %v1283 = vand.u32 %v529, 4294901760
    %v1284 = vsub.f32 %v529, %v1283
    %v1285 = vand.u32 %v1284, 4294901760
    %1286 = vmatpush1.msra.mxu0 %v1285
    %1287 = vmatprep.subr.mxu0 0.0
    %v1288 = vand.u32 %v530, 4294901760
    %v1289 = vsub.f32 %v530, %v1288
    %v1290 = vand.u32 %v1289, 4294901760
    %1291 = vmatpush1.msra.mxu0 %v1290
    %1292 = vmatprep.subr.mxu0 0.0
    %v1293 = vand.u32 %v531, 4294901760
    %v1294 = vsub.f32 %v531, %v1293
    %v1295 = vand.u32 %v1294, 4294901760
    %1296 = vmatpush1.msra.mxu0 %v1295
    %1297 = vmatprep.subr.mxu0 0.0
    %v1298 = vand.u32 %v532, 4294901760
    %v1299 = vsub.f32 %v532, %v1298
    %v1300 = vand.u32 %v1299, 4294901760
    %1301 = vmatpush1.msra.mxu0 %v1300
    %1302 = vmatprep.subr.mxu0 0.0
    %v1303 = vand.u32 %v533, 4294901760
    %v1304 = vsub.f32 %v533, %v1303
    %v1305 = vand.u32 %v1304, 4294901760
    %1306 = vmatpush1.msra.mxu0 %v1305
    %1307 = vmatprep.subr.mxu0 0.0
    %v1308 = vand.u32 %v534, 4294901760
    %v1309 = vsub.f32 %v534, %v1308
    %v1310 = vand.u32 %v1309, 4294901760
    %1311 = vmatpush1.msra.mxu0 %v1310
    %1312 = vmatprep.subr.mxu0 0.0
    %v1313 = vand.u32 %v535, 4294901760
    %v1314 = vsub.f32 %v535, %v1313
    %v1315 = vand.u32 %v1314, 4294901760
    %1316 = vmatpush1.msra.mxu0 %v1315
    %1317 = vmatprep.subr.mxu0 0.0
    %v1318 = vand.u32 %v536, 4294901760
    %v1319 = vsub.f32 %v536, %v1318
    %v1320 = vand.u32 %v1319, 4294901760
    %1321 = vmatpush1.msra.mxu0 %v1320
    %1322 = vmatprep.subr.mxu0 0.0
    %v1323 = vand.u32 %v537, 4294901760
    %v1324 = vsub.f32 %v537, %v1323
    %v1325 = vand.u32 %v1324, 4294901760
    %1326 = vmatpush1.msra.mxu0 %v1325
    %1327 = vmatprep.subr.mxu0 0.0
    %v1328 = vand.u32 %v538, 4294901760
    %v1329 = vsub.f32 %v538, %v1328
    %v1330 = vand.u32 %v1329, 4294901760
    %1331 = vmatpush1.msra.mxu0 %v1330
    %1332 = vmatprep.subr.mxu0 0.0
    %v1333 = vand.u32 %v539, 4294901760
    %v1334 = vsub.f32 %v539, %v1333
    %v1335 = vand.u32 %v1334, 4294901760
    %1336 = vmatpush1.msra.mxu0 %v1335
    %1337 = vmatprep.subr.mxu0 0.0
    %v1338 = vand.u32 %v540, 4294901760
    %v1339 = vsub.f32 %v540, %v1338
    %v1340 = vand.u32 %v1339, 4294901760
    %1341 = vmatpush1.msra.mxu0 %v1340
    %1342 = vmatprep.subr.mxu0 0.0
    %v1343 = vand.u32 %v541, 4294901760
    %v1344 = vsub.f32 %v541, %v1343
    %v1345 = vand.u32 %v1344, 4294901760
    %1346 = vmatpush1.msra.mxu0 %v1345
    %1347 = vmatprep.subr.mxu0 0.0
    %v1348 = vand.u32 %v542, 4294901760
    %v1349 = vsub.f32 %v542, %v1348
    %v1350 = vand.u32 %v1349, 4294901760
    %1351 = vmatpush1.msra.mxu0 %v1350
    %1352 = vmatprep.subr.mxu0 0.0
    %v1353 = vand.u32 %v543, 4294901760
    %v1354 = vsub.f32 %v543, %v1353
    %v1355 = vand.u32 %v1354, 4294901760
    %1356 = vmatpush1.msra.mxu0 %v1355
    %1357 = vmatprep.subr.mxu0 0.0
    %v1358 = vand.u32 %v544, 4294901760
    %v1359 = vsub.f32 %v544, %v1358
    %v1360 = vand.u32 %v1359, 4294901760
    %1361 = vmatpush1.msra.mxu0 %v1360
    %1362 = vmatprep.subr.mxu0 0.0
    %v1363 = vand.u32 %v545, 4294901760
    %v1364 = vsub.f32 %v545, %v1363
    %v1365 = vand.u32 %v1364, 4294901760
    %1366 = vmatpush1.msra.mxu0 %v1365
    %v1367 = vand.u32 %v509, 4294901760
    %1368 = vmatprep.mubr.f32.mxu0 %v1367
    %v1369 = vand.u32 %v508, 4294901760
    %1370 = vmatmul.mubr.f32.gmra.mrb[0].mxu0 %v1369
    %v1371 = vpop.f32.mrb[0].mxu0
    %v1372 = vadd.f32 %v1204, %v1371
    %v1373 = vpop.f32.mrb[0].mxu0
    %1374 = vdwg.mxu0
    %1375 = vmatprep.subr.mxu0 0.0
    %v1376 = vand.u32 %v514, 4294901760
    %1377 = vmatpush1.msra.mxu0 %v1376
    %1378 = vmatprep.subr.mxu0 0.0
    %v1379 = vand.u32 %v515, 4294901760
    %1380 = vmatpush1.msra.mxu0 %v1379
    %1381 = vmatprep.subr.mxu0 0.0
    %v1382 = vand.u32 %v516, 4294901760
    %1383 = vmatpush1.msra.mxu0 %v1382
    %1384 = vmatprep.subr.mxu0 0.0
    %v1385 = vand.u32 %v517, 4294901760
    %1386 = vmatpush1.msra.mxu0 %v1385
    %1387 = vmatprep.subr.mxu0 0.0
    %v1388 = vand.u32 %v518, 4294901760
    %1389 = vmatpush1.msra.mxu0 %v1388
    %1390 = vmatprep.subr.mxu0 0.0
    %v1391 = vand.u32 %v519, 4294901760
    %1392 = vmatpush1.msra.mxu0 %v1391
    %1393 = vmatprep.subr.mxu0 0.0
    %v1394 = vand.u32 %v520, 4294901760
    %1395 = vmatpush1.msra.mxu0 %v1394
    %1396 = vmatprep.subr.mxu0 0.0
    %v1397 = vand.u32 %v521, 4294901760
    %1398 = vmatpush1.msra.mxu0 %v1397
    %1399 = vmatprep.subr.mxu0 0.0
    %v1400 = vand.u32 %v522, 4294901760
    %1401 = vmatpush1.msra.mxu0 %v1400
    %1402 = vmatprep.subr.mxu0 0.0
    %v1403 = vand.u32 %v523, 4294901760
    %1404 = vmatpush1.msra.mxu0 %v1403
    %1405 = vmatprep.subr.mxu0 0.0
    %v1406 = vand.u32 %v524, 4294901760
    %1407 = vmatpush1.msra.mxu0 %v1406
    %1408 = vmatprep.subr.mxu0 0.0
    %v1409 = vand.u32 %v525, 4294901760
    %1410 = vmatpush1.msra.mxu0 %v1409
    %1411 = vmatprep.subr.mxu0 0.0
    %v1412 = vand.u32 %v526, 4294901760
    %1413 = vmatpush1.msra.mxu0 %v1412
    %1414 = vmatprep.subr.mxu0 0.0
    %v1415 = vand.u32 %v527, 4294901760
    %1416 = vmatpush1.msra.mxu0 %v1415
    %1417 = vmatprep.subr.mxu0 0.0
    %v1418 = vand.u32 %v528, 4294901760
    %1419 = vmatpush1.msra.mxu0 %v1418
    %1420 = vmatprep.subr.mxu0 0.0
    %v1421 = vand.u32 %v529, 4294901760
    %1422 = vmatpush1.msra.mxu0 %v1421
    %1423 = vmatprep.subr.mxu0 0.0
    %v1424 = vand.u32 %v530, 4294901760
    %1425 = vmatpush1.msra.mxu0 %v1424
    %1426 = vmatprep.subr.mxu0 0.0
    %v1427 = vand.u32 %v531, 4294901760
    %1428 = vmatpush1.msra.mxu0 %v1427
    %1429 = vmatprep.subr.mxu0 0.0
    %v1430 = vand.u32 %v532, 4294901760
    %1431 = vmatpush1.msra.mxu0 %v1430
    %1432 = vmatprep.subr.mxu0 0.0
    %v1433 = vand.u32 %v533, 4294901760
    %1434 = vmatpush1.msra.mxu0 %v1433
    %1435 = vmatprep.subr.mxu0 0.0
    %v1436 = vand.u32 %v534, 4294901760
    %1437 = vmatpush1.msra.mxu0 %v1436
    %1438 = vmatprep.subr.mxu0 0.0
    %v1439 = vand.u32 %v535, 4294901760
    %1440 = vmatpush1.msra.mxu0 %v1439
    %1441 = vmatprep.subr.mxu0 0.0
    %v1442 = vand.u32 %v536, 4294901760
    %1443 = vmatpush1.msra.mxu0 %v1442
    %1444 = vmatprep.subr.mxu0 0.0
    %v1445 = vand.u32 %v537, 4294901760
    %1446 = vmatpush1.msra.mxu0 %v1445
    %1447 = vmatprep.subr.mxu0 0.0
    %v1448 = vand.u32 %v538, 4294901760
    %1449 = vmatpush1.msra.mxu0 %v1448
    %1450 = vmatprep.subr.mxu0 0.0
    %v1451 = vand.u32 %v539, 4294901760
    %1452 = vmatpush1.msra.mxu0 %v1451
    %1453 = vmatprep.subr.mxu0 0.0
    %v1454 = vand.u32 %v540, 4294901760
    %1455 = vmatpush1.msra.mxu0 %v1454
    %1456 = vmatprep.subr.mxu0 0.0
    %v1457 = vand.u32 %v541, 4294901760
    %1458 = vmatpush1.msra.mxu0 %v1457
    %1459 = vmatprep.subr.mxu0 0.0
    %v1460 = vand.u32 %v542, 4294901760
    %1461 = vmatpush1.msra.mxu0 %v1460
    %1462 = vmatprep.subr.mxu0 0.0
    %v1463 = vand.u32 %v543, 4294901760
    %1464 = vmatpush1.msra.mxu0 %v1463
    %1465 = vmatprep.subr.mxu0 0.0
    %v1466 = vand.u32 %v544, 4294901760
    %1467 = vmatpush1.msra.mxu0 %v1466
    %1468 = vmatprep.subr.mxu0 0.0
    %v1469 = vand.u32 %v545, 4294901760
    %1470 = vmatpush1.msra.mxu0 %v1469
    %v1471 = vand.u32 %v509, 4294901760
    %1472 = vmatprep.mubr.f32.mxu0 %v1471
    %v1473 = vand.u32 %v508, 4294901760
    %1474 = vmatmul.mubr.f32.gmra.mrb[0].mxu0 %v1473
    %v1475 = vpop.f32.mrb[0].mxu0
    %v1476 = vadd.f32 %v1372, %v1475
    %v1477 = vpop.f32.mrb[0].mxu0
    %1478 = vdwg.mxu0
    %1479 = vmatprep.subr.mxu0 0.0
    %v1480 = vand.u32 %v546, 4294901760
    %1481 = vmatpush1.msra.mxu0 %v1480
    %1482 = vmatprep.subr.mxu0 0.0
    %v1483 = vand.u32 %v547, 4294901760
    %1484 = vmatpush1.msra.mxu0 %v1483
    %1485 = vmatprep.subr.mxu0 0.0
    %v1486 = vand.u32 %v548, 4294901760
    %1487 = vmatpush1.msra.mxu0 %v1486
    %1488 = vmatprep.subr.mxu0 0.0
    %v1489 = vand.u32 %v549, 4294901760
    %1490 = vmatpush1.msra.mxu0 %v1489
    %1491 = vmatprep.subr.mxu0 0.0
    %v1492 = vand.u32 %v550, 4294901760
    %1493 = vmatpush1.msra.mxu0 %v1492
    %1494 = vmatprep.subr.mxu0 0.0
    %v1495 = vand.u32 %v551, 4294901760
    %1496 = vmatpush1.msra.mxu0 %v1495
    %1497 = vmatprep.subr.mxu0 0.0
    %v1498 = vand.u32 %v552, 4294901760
    %1499 = vmatpush1.msra.mxu0 %v1498
    %1500 = vmatprep.subr.mxu0 0.0
    %v1501 = vand.u32 %v553, 4294901760
    %1502 = vmatpush1.msra.mxu0 %v1501
    %1503 = vmatprep.subr.mxu0 0.0
    %v1504 = vand.u32 %v554, 4294901760
    %1505 = vmatpush1.msra.mxu0 %v1504
    %1506 = vmatprep.subr.mxu0 0.0
    %v1507 = vand.u32 %v555, 4294901760
    %1508 = vmatpush1.msra.mxu0 %v1507
    %1509 = vmatprep.subr.mxu0 0.0
    %v1510 = vand.u32 %v556, 4294901760
    %1511 = vmatpush1.msra.mxu0 %v1510
    %1512 = vmatprep.subr.mxu0 0.0
    %v1513 = vand.u32 %v557, 4294901760
    %1514 = vmatpush1.msra.mxu0 %v1513
    %1515 = vmatprep.subr.mxu0 0.0
    %v1516 = vand.u32 %v558, 4294901760
    %1517 = vmatpush1.msra.mxu0 %v1516
    %1518 = vmatprep.subr.mxu0 0.0
    %v1519 = vand.u32 %v559, 4294901760
    %1520 = vmatpush1.msra.mxu0 %v1519
    %1521 = vmatprep.subr.mxu0 0.0
    %v1522 = vand.u32 %v560, 4294901760
    %1523 = vmatpush1.msra.mxu0 %v1522
    %1524 = vmatprep.subr.mxu0 0.0
    %v1525 = vand.u32 %v561, 4294901760
    %1526 = vmatpush1.msra.mxu0 %v1525
    %1527 = vmatprep.subr.mxu0 0.0
    %v1528 = vand.u32 %v562, 4294901760
    %1529 = vmatpush1.msra.mxu0 %v1528
    %1530 = vmatprep.subr.mxu0 0.0
    %v1531 = vand.u32 %v563, 4294901760
    %1532 = vmatpush1.msra.mxu0 %v1531
    %1533 = vmatprep.subr.mxu0 0.0
    %v1534 = vand.u32 %v564, 4294901760
    %1535 = vmatpush1.msra.mxu0 %v1534
    %1536 = vmatprep.subr.mxu0 0.0
    %v1537 = vand.u32 %v565, 4294901760
    %1538 = vmatpush1.msra.mxu0 %v1537
    %1539 = vmatprep.subr.mxu0 0.0
    %v1540 = vand.u32 %v566, 4294901760
    %1541 = vmatpush1.msra.mxu0 %v1540
    %1542 = vmatprep.subr.mxu0 0.0
    %v1543 = vand.u32 %v567, 4294901760
    %1544 = vmatpush1.msra.mxu0 %v1543
    %1545 = vmatprep.subr.mxu0 0.0
    %v1546 = vand.u32 %v568, 4294901760
    %1547 = vmatpush1.msra.mxu0 %v1546
    %1548 = vmatprep.subr.mxu0 0.0
    %v1549 = vand.u32 %v569, 4294901760
    %1550 = vmatpush1.msra.mxu0 %v1549
    %1551 = vmatprep.subr.mxu0 0.0
    %v1552 = vand.u32 %v570, 4294901760
    %1553 = vmatpush1.msra.mxu0 %v1552
    %1554 = vmatprep.subr.mxu0 0.0
    %v1555 = vand.u32 %v571, 4294901760
    %1556 = vmatpush1.msra.mxu0 %v1555
    %1557 = vmatprep.subr.mxu0 0.0
    %v1558 = vand.u32 %v572, 4294901760
    %1559 = vmatpush1.msra.mxu0 %v1558
    %1560 = vmatprep.subr.mxu0 0.0
    %v1561 = vand.u32 %v573, 4294901760
    %1562 = vmatpush1.msra.mxu0 %v1561
    %1563 = vmatprep.subr.mxu0 0.0
    %v1564 = vand.u32 %v574, 4294901760
    %1565 = vmatpush1.msra.mxu0 %v1564
    %1566 = vmatprep.subr.mxu0 0.0
    %v1567 = vand.u32 %v575, 4294901760
    %1568 = vmatpush1.msra.mxu0 %v1567
    %1569 = vmatprep.subr.mxu0 0.0
    %v1570 = vand.u32 %v576, 4294901760
    %1571 = vmatpush1.msra.mxu0 %v1570
    %1572 = vmatprep.subr.mxu0 0.0
    %v1573 = vand.u32 %v577, 4294901760
    %1574 = vmatpush1.msra.mxu0 %v1573
    %v1575 = vand.u32 %v511, 4294901760
    %v1576 = vsub.f32 %v511, %v1575
    %v1577 = vand.u32 %v1576, 4294901760
    %v1578 = vsub.f32 %v1576, %v1577
    %v1579 = vand.u32 %v1578, 4294901760
    %1580 = vmatprep.mubr.f32.mxu0 %v1579
    %v1581 = vand.u32 %v510, 4294901760
    %v1582 = vsub.f32 %v510, %v1581
    %v1583 = vand.u32 %v1582, 4294901760
    %v1584 = vsub.f32 %v1582, %v1583
    %v1585 = vand.u32 %v1584, 4294901760
    %1586 = vmatmul.mubr.f32.gmra.mrb[0].mxu0 %v1585
    %v1587 = vpop.f32.mrb[0].mxu0
    %v1588 = vadd.f32 %v1476, %v1587
    %v1589 = vpop.f32.mrb[0].mxu0
    %1590 = vdwg.mxu0
    %1591 = vmatprep.subr.mxu0 0.0
    %v1592 = vand.u32 %v546, 4294901760
    %v1593 = vsub.f32 %v546, %v1592
    %v1594 = vand.u32 %v1593, 4294901760
    %v1595 = vsub.f32 %v1593, %v1594
    %v1596 = vand.u32 %v1595, 4294901760
    %1597 = vmatpush1.msra.mxu0 %v1596
    %1598 = vmatprep.subr.mxu0 0.0
    %v1599 = vand.u32 %v547, 4294901760
    %v1600 = vsub.f32 %v547, %v1599
    %v1601 = vand.u32 %v1600, 4294901760
    %v1602 = vsub.f32 %v1600, %v1601
    %v1603 = vand.u32 %v1602, 4294901760
    %1604 = vmatpush1.msra.mxu0 %v1603
    %1605 = vmatprep.subr.mxu0 0.0
    %v1606 = vand.u32 %v548, 4294901760
    %v1607 = vsub.f32 %v548, %v1606
    %v1608 = vand.u32 %v1607, 4294901760
    %v1609 = vsub.f32 %v1607, %v1608
    %v1610 = vand.u32 %v1609, 4294901760
    %1611 = vmatpush1.msra.mxu0 %v1610
    %1612 = vmatprep.subr.mxu0 0.0
    %v1613 = vand.u32 %v549, 4294901760
    %v1614 = vsub.f32 %v549, %v1613
    %v1615 = vand.u32 %v1614, 4294901760
    %v1616 = vsub.f32 %v1614, %v1615
    %v1617 = vand.u32 %v1616, 4294901760
    %1618 = vmatpush1.msra.mxu0 %v1617
    %1619 = vmatprep.subr.mxu0 0.0
    %v1620 = vand.u32 %v550, 4294901760
    %v1621 = vsub.f32 %v550, %v1620
    %v1622 = vand.u32 %v1621, 4294901760
    %v1623 = vsub.f32 %v1621, %v1622
    %v1624 = vand.u32 %v1623, 4294901760
    %1625 = vmatpush1.msra.mxu0 %v1624
    %1626 = vmatprep.subr.mxu0 0.0
    %v1627 = vand.u32 %v551, 4294901760
    %v1628 = vsub.f32 %v551, %v1627
    %v1629 = vand.u32 %v1628, 4294901760
    %v1630 = vsub.f32 %v1628, %v1629
    %v1631 = vand.u32 %v1630, 4294901760
    %1632 = vmatpush1.msra.mxu0 %v1631
    %1633 = vmatprep.subr.mxu0 0.0
    %v1634 = vand.u32 %v552, 4294901760
    %v1635 = vsub.f32 %v552, %v1634
    %v1636 = vand.u32 %v1635, 4294901760
    %v1637 = vsub.f32 %v1635, %v1636
    %v1638 = vand.u32 %v1637, 4294901760
    %1639 = vmatpush1.msra.mxu0 %v1638
    %1640 = vmatprep.subr.mxu0 0.0
    %v1641 = vand.u32 %v553, 4294901760
    %v1642 = vsub.f32 %v553, %v1641
    %v1643 = vand.u32 %v1642, 4294901760
    %v1644 = vsub.f32 %v1642, %v1643
    %v1645 = vand.u32 %v1644, 4294901760
    %1646 = vmatpush1.msra.mxu0 %v1645
    %1647 = vmatprep.subr.mxu0 0.0
    %v1648 = vand.u32 %v554, 4294901760
    %v1649 = vsub.f32 %v554, %v1648
    %v1650 = vand.u32 %v1649, 4294901760
    %v1651 = vsub.f32 %v1649, %v1650
    %v1652 = vand.u32 %v1651, 4294901760
    %1653 = vmatpush1.msra.mxu0 %v1652
    %1654 = vmatprep.subr.mxu0 0.0
    %v1655 = vand.u32 %v555, 4294901760
    %v1656 = vsub.f32 %v555, %v1655
    %v1657 = vand.u32 %v1656, 4294901760
    %v1658 = vsub.f32 %v1656, %v1657
    %v1659 = vand.u32 %v1658, 4294901760
    %1660 = vmatpush1.msra.mxu0 %v1659
    %1661 = vmatprep.subr.mxu0 0.0
    %v1662 = vand.u32 %v556, 4294901760
    %v1663 = vsub.f32 %v556, %v1662
    %v1664 = vand.u32 %v1663, 4294901760
    %v1665 = vsub.f32 %v1663, %v1664
    %v1666 = vand.u32 %v1665, 4294901760
    %1667 = vmatpush1.msra.mxu0 %v1666
    %1668 = vmatprep.subr.mxu0 0.0
    %v1669 = vand.u32 %v557, 4294901760
    %v1670 = vsub.f32 %v557, %v1669
    %v1671 = vand.u32 %v1670, 4294901760
    %v1672 = vsub.f32 %v1670, %v1671
    %v1673 = vand.u32 %v1672, 4294901760
    %1674 = vmatpush1.msra.mxu0 %v1673
    %1675 = vmatprep.subr.mxu0 0.0
    %v1676 = vand.u32 %v558, 4294901760
    %v1677 = vsub.f32 %v558, %v1676
    %v1678 = vand.u32 %v1677, 4294901760
    %v1679 = vsub.f32 %v1677, %v1678
    %v1680 = vand.u32 %v1679, 4294901760
    %1681 = vmatpush1.msra.mxu0 %v1680
    %1682 = vmatprep.subr.mxu0 0.0
    %v1683 = vand.u32 %v559, 4294901760
    %v1684 = vsub.f32 %v559, %v1683
    %v1685 = vand.u32 %v1684, 4294901760
    %v1686 = vsub.f32 %v1684, %v1685
    %v1687 = vand.u32 %v1686, 4294901760
    %1688 = vmatpush1.msra.mxu0 %v1687
    %1689 = vmatprep.subr.mxu0 0.0
    %v1690 = vand.u32 %v560, 4294901760
    %v1691 = vsub.f32 %v560, %v1690
    %v1692 = vand.u32 %v1691, 4294901760
    %v1693 = vsub.f32 %v1691, %v1692
    %v1694 = vand.u32 %v1693, 4294901760
    %1695 = vmatpush1.msra.mxu0 %v1694
    %1696 = vmatprep.subr.mxu0 0.0
    %v1697 = vand.u32 %v561, 4294901760
    %v1698 = vsub.f32 %v561, %v1697
    %v1699 = vand.u32 %v1698, 4294901760
    %v1700 = vsub.f32 %v1698, %v1699
    %v1701 = vand.u32 %v1700, 4294901760
    %1702 = vmatpush1.msra.mxu0 %v1701
    %1703 = vmatprep.subr.mxu0 0.0
    %v1704 = vand.u32 %v562, 4294901760
    %v1705 = vsub.f32 %v562, %v1704
    %v1706 = vand.u32 %v1705, 4294901760
    %v1707 = vsub.f32 %v1705, %v1706
    %v1708 = vand.u32 %v1707, 4294901760
    %1709 = vmatpush1.msra.mxu0 %v1708
    %1710 = vmatprep.subr.mxu0 0.0
    %v1711 = vand.u32 %v563, 4294901760
    %v1712 = vsub.f32 %v563, %v1711
    %v1713 = vand.u32 %v1712, 4294901760
    %v1714 = vsub.f32 %v1712, %v1713
    %v1715 = vand.u32 %v1714, 4294901760
    %1716 = vmatpush1.msra.mxu0 %v1715
    %1717 = vmatprep.subr.mxu0 0.0
    %v1718 = vand.u32 %v564, 4294901760
    %v1719 = vsub.f32 %v564, %v1718
    %v1720 = vand.u32 %v1719, 4294901760
    %v1721 = vsub.f32 %v1719, %v1720
    %v1722 = vand.u32 %v1721, 4294901760
    %1723 = vmatpush1.msra.mxu0 %v1722
    %1724 = vmatprep.subr.mxu0 0.0
    %v1725 = vand.u32 %v565, 4294901760
    %v1726 = vsub.f32 %v565, %v1725
    %v1727 = vand.u32 %v1726, 4294901760
    %v1728 = vsub.f32 %v1726, %v1727
    %v1729 = vand.u32 %v1728, 4294901760
    %1730 = vmatpush1.msra.mxu0 %v1729
    %1731 = vmatprep.subr.mxu0 0.0
    %v1732 = vand.u32 %v566, 4294901760
    %v1733 = vsub.f32 %v566, %v1732
    %v1734 = vand.u32 %v1733, 4294901760
    %v1735 = vsub.f32 %v1733, %v1734
    %v1736 = vand.u32 %v1735, 4294901760
    %1737 = vmatpush1.msra.mxu0 %v1736
    %1738 = vmatprep.subr.mxu0 0.0
    %v1739 = vand.u32 %v567, 4294901760
    %v1740 = vsub.f32 %v567, %v1739
    %v1741 = vand.u32 %v1740, 4294901760
    %v1742 = vsub.f32 %v1740, %v1741
    %v1743 = vand.u32 %v1742, 4294901760
    %1744 = vmatpush1.msra.mxu0 %v1743
    %1745 = vmatprep.subr.mxu0 0.0
    %v1746 = vand.u32 %v568, 4294901760
    %v1747 = vsub.f32 %v568, %v1746
    %v1748 = vand.u32 %v1747, 4294901760
    %v1749 = vsub.f32 %v1747, %v1748
    %v1750 = vand.u32 %v1749, 4294901760
    %1751 = vmatpush1.msra.mxu0 %v1750
    %1752 = vmatprep.subr.mxu0 0.0
    %v1753 = vand.u32 %v569, 4294901760
    %v1754 = vsub.f32 %v569, %v1753
    %v1755 = vand.u32 %v1754, 4294901760
    %v1756 = vsub.f32 %v1754, %v1755
    %v1757 = vand.u32 %v1756, 4294901760
    %1758 = vmatpush1.msra.mxu0 %v1757
    %1759 = vmatprep.subr.mxu0 0.0
    %v1760 = vand.u32 %v570, 4294901760
    %v1761 = vsub.f32 %v570, %v1760
    %v1762 = vand.u32 %v1761, 4294901760
    %v1763 = vsub.f32 %v1761, %v1762
    %v1764 = vand.u32 %v1763, 4294901760
    %1765 = vmatpush1.msra.mxu0 %v1764
    %1766 = vmatprep.subr.mxu0 0.0
    %v1767 = vand.u32 %v571, 4294901760
    %v1768 = vsub.f32 %v571, %v1767
    %v1769 = vand.u32 %v1768, 4294901760
    %v1770 = vsub.f32 %v1768, %v1769
    %v1771 = vand.u32 %v1770, 4294901760
    %1772 = vmatpush1.msra.mxu0 %v1771
    %1773 = vmatprep.subr.mxu0 0.0
    %v1774 = vand.u32 %v572, 4294901760
    %v1775 = vsub.f32 %v572, %v1774
    %v1776 = vand.u32 %v1775, 4294901760
    %v1777 = vsub.f32 %v1775, %v1776
    %v1778 = vand.u32 %v1777, 4294901760
    %1779 = vmatpush1.msra.mxu0 %v1778
    %1780 = vmatprep.subr.mxu0 0.0
    %v1781 = vand.u32 %v573, 4294901760
    %v1782 = vsub.f32 %v573, %v1781
    %v1783 = vand.u32 %v1782, 4294901760
    %v1784 = vsub.f32 %v1782, %v1783
    %v1785 = vand.u32 %v1784, 4294901760
    %1786 = vmatpush1.msra.mxu0 %v1785
    %1787 = vmatprep.subr.mxu0 0.0
    %v1788 = vand.u32 %v574, 4294901760
    %v1789 = vsub.f32 %v574, %v1788
    %v1790 = vand.u32 %v1789, 4294901760
    %v1791 = vsub.f32 %v1789, %v1790
    %v1792 = vand.u32 %v1791, 4294901760
    %1793 = vmatpush1.msra.mxu0 %v1792
    %1794 = vmatprep.subr.mxu0 0.0
    %v1795 = vand.u32 %v575, 4294901760
    %v1796 = vsub.f32 %v575, %v1795
    %v1797 = vand.u32 %v1796, 4294901760
    %v1798 = vsub.f32 %v1796, %v1797
    %v1799 = vand.u32 %v1798, 4294901760
    %1800 = vmatpush1.msra.mxu0 %v1799
    %1801 = vmatprep.subr.mxu0 0.0
    %v1802 = vand.u32 %v576, 4294901760
    %v1803 = vsub.f32 %v576, %v1802
    %v1804 = vand.u32 %v1803, 4294901760
    %v1805 = vsub.f32 %v1803, %v1804
    %v1806 = vand.u32 %v1805, 4294901760
    %1807 = vmatpush1.msra.mxu0 %v1806
    %1808 = vmatprep.subr.mxu0 0.0
    %v1809 = vand.u32 %v577, 4294901760
    %v1810 = vsub.f32 %v577, %v1809
    %v1811 = vand.u32 %v1810, 4294901760
    %v1812 = vsub.f32 %v1810, %v1811
    %v1813 = vand.u32 %v1812, 4294901760
    %1814 = vmatpush1.msra.mxu0 %v1813
    %v1815 = vand.u32 %v511, 4294901760
    %1816 = vmatprep.mubr.f32.mxu0 %v1815
    %v1817 = vand.u32 %v510, 4294901760
    %1818 = vmatmul.mubr.f32.gmra.mrb[0].mxu0 %v1817
    %v1819 = vpop.f32.mrb[0].mxu0
    %v1820 = vadd.f32 %v1588, %v1819
    %v1821 = vpop.f32.mrb[0].mxu0
    %1822 = vdwg.mxu0
    %1823 = vmatprep.subr.mxu0 0.0
    %v1824 = vand.u32 %v546, 4294901760
    %v1825 = vsub.f32 %v546, %v1824
    %1826 = vmatpush1.msra.mxu0 %v1825
    %1827 = vmatprep.subr.mxu0 0.0
    %v1828 = vand.u32 %v547, 4294901760
    %v1829 = vsub.f32 %v547, %v1828
    %1830 = vmatpush1.msra.mxu0 %v1829
    %1831 = vmatprep.subr.mxu0 0.0
    %v1832 = vand.u32 %v548, 4294901760
    %v1833 = vsub.f32 %v548, %v1832
    %1834 = vmatpush1.msra.mxu0 %v1833
    %1835 = vmatprep.subr.mxu0 0.0
    %v1836 = vand.u32 %v549, 4294901760
    %v1837 = vsub.f32 %v549, %v1836
    %1838 = vmatpush1.msra.mxu0 %v1837
    %1839 = vmatprep.subr.mxu0 0.0
    %v1840 = vand.u32 %v550, 4294901760
    %v1841 = vsub.f32 %v550, %v1840
    %1842 = vmatpush1.msra.mxu0 %v1841
    %1843 = vmatprep.subr.mxu0 0.0
    %v1844 = vand.u32 %v551, 4294901760
    %v1845 = vsub.f32 %v551, %v1844
    %1846 = vmatpush1.msra.mxu0 %v1845
    %1847 = vmatprep.subr.mxu0 0.0
    %v1848 = vand.u32 %v552, 4294901760
    %v1849 = vsub.f32 %v552, %v1848
    %1850 = vmatpush1.msra.mxu0 %v1849
    %1851 = vmatprep.subr.mxu0 0.0
    %v1852 = vand.u32 %v553, 4294901760
    %v1853 = vsub.f32 %v553, %v1852
    %1854 = vmatpush1.msra.mxu0 %v1853
    %1855 = vmatprep.subr.mxu0 0.0
    %v1856 = vand.u32 %v554, 4294901760
    %v1857 = vsub.f32 %v554, %v1856
    %1858 = vmatpush1.msra.mxu0 %v1857
    %1859 = vmatprep.subr.mxu0 0.0
    %v1860 = vand.u32 %v555, 4294901760
    %v1861 = vsub.f32 %v555, %v1860
    %1862 = vmatpush1.msra.mxu0 %v1861
    %1863 = vmatprep.subr.mxu0 0.0
    %v1864 = vand.u32 %v556, 4294901760
    %v1865 = vsub.f32 %v556, %v1864
    %1866 = vmatpush1.msra.mxu0 %v1865
    %1867 = vmatprep.subr.mxu0 0.0
    %v1868 = vand.u32 %v557, 4294901760
    %v1869 = vsub.f32 %v557, %v1868
    %1870 = vmatpush1.msra.mxu0 %v1869
    %1871 = vmatprep.subr.mxu0 0.0
    %v1872 = vand.u32 %v558, 4294901760
    %v1873 = vsub.f32 %v558, %v1872
    %1874 = vmatpush1.msra.mxu0 %v1873
    %1875 = vmatprep.subr.mxu0 0.0
    %v1876 = vand.u32 %v559, 4294901760
    %v1877 = vsub.f32 %v559, %v1876
    %1878 = vmatpush1.msra.mxu0 %v1877
    %1879 = vmatprep.subr.mxu0 0.0
    %v1880 = vand.u32 %v560, 4294901760
    %v1881 = vsub.f32 %v560, %v1880
    %1882 = vmatpush1.msra.mxu0 %v1881
    %1883 = vmatprep.subr.mxu0 0.0
    %v1884 = vand.u32 %v561, 4294901760
    %v1885 = vsub.f32 %v561, %v1884
    %1886 = vmatpush1.msra.mxu0 %v1885
    %1887 = vmatprep.subr.mxu0 0.0
    %v1888 = vand.u32 %v562, 4294901760
    %v1889 = vsub.f32 %v562, %v1888
    %1890 = vmatpush1.msra.mxu0 %v1889
    %1891 = vmatprep.subr.mxu0 0.0
    %v1892 = vand.u32 %v563, 4294901760
    %v1893 = vsub.f32 %v563, %v1892
    %1894 = vmatpush1.msra.mxu0 %v1893
    %1895 = vmatprep.subr.mxu0 0.0
    %v1896 = vand.u32 %v564, 4294901760
    %v1897 = vsub.f32 %v564, %v1896
    %1898 = vmatpush1.msra.mxu0 %v1897
    %1899 = vmatprep.subr.mxu0 0.0
    %v1900 = vand.u32 %v565, 4294901760
    %v1901 = vsub.f32 %v565, %v1900
    %1902 = vmatpush1.msra.mxu0 %v1901
    %1903 = vmatprep.subr.mxu0 0.0
    %v1904 = vand.u32 %v566, 4294901760
    %v1905 = vsub.f32 %v566, %v1904
    %1906 = vmatpush1.msra.mxu0 %v1905
    %1907 = vmatprep.subr.mxu0 0.0
    %v1908 = vand.u32 %v567, 4294901760
    %v1909 = vsub.f32 %v567, %v1908
    %1910 = vmatpush1.msra.mxu0 %v1909
    %1911 = vmatprep.subr.mxu0 0.0
    %v1912 = vand.u32 %v568, 4294901760
    %v1913 = vsub.f32 %v568, %v1912
    %1914 = vmatpush1.msra.mxu0 %v1913
    %1915 = vmatprep.subr.mxu0 0.0
    %v1916 = vand.u32 %v569, 4294901760
    %v1917 = vsub.f32 %v569, %v1916
    %1918 = vmatpush1.msra.mxu0 %v1917
    %1919 = vmatprep.subr.mxu0 0.0
    %v1920 = vand.u32 %v570, 4294901760
    %v1921 = vsub.f32 %v570, %v1920
    %1922 = vmatpush1.msra.mxu0 %v1921
    %1923 = vmatprep.subr.mxu0 0.0
    %v1924 = vand.u32 %v571, 4294901760
    %v1925 = vsub.f32 %v571, %v1924
    %1926 = vmatpush1.msra.mxu0 %v1925
    %1927 = vmatprep.subr.mxu0 0.0
    %v1928 = vand.u32 %v572, 4294901760
    %v1929 = vsub.f32 %v572, %v1928
    %1930 = vmatpush1.msra.mxu0 %v1929
    %1931 = vmatprep.subr.mxu0 0.0
    %v1932 = vand.u32 %v573, 4294901760
    %v1933 = vsub.f32 %v573, %v1932
    %1934 = vmatpush1.msra.mxu0 %v1933
    %1935 = vmatprep.subr.mxu0 0.0
    %v1936 = vand.u32 %v574, 4294901760
    %v1937 = vsub.f32 %v574, %v1936
    %1938 = vmatpush1.msra.mxu0 %v1937
    %1939 = vmatprep.subr.mxu0 0.0
    %v1940 = vand.u32 %v575, 4294901760
    %v1941 = vsub.f32 %v575, %v1940
    %1942 = vmatpush1.msra.mxu0 %v1941
    %1943 = vmatprep.subr.mxu0 0.0
    %v1944 = vand.u32 %v576, 4294901760
    %v1945 = vsub.f32 %v576, %v1944
    %1946 = vmatpush1.msra.mxu0 %v1945
    %1947 = vmatprep.subr.mxu0 0.0
    %v1948 = vand.u32 %v577, 4294901760
    %v1949 = vsub.f32 %v577, %v1948
    %1950 = vmatpush1.msra.mxu0 %v1949
    %v1951 = vand.u32 %v511, 4294901760
    %v1952 = vsub.f32 %v511, %v1951
    %1953 = vmatprep.mubr.f32.mxu0 %v1952
    %v1954 = vand.u32 %v510, 4294901760
    %v1955 = vsub.f32 %v510, %v1954
    %1956 = vmatmul.mubr.f32.gmra.mrb[0].mxu0 %v1955
    %v1957 = vpop.f32.mrb[0].mxu0
    %v1958 = vadd.f32 %v1820, %v1957
    %v1959 = vpop.f32.mrb[0].mxu0
    %1960 = vdwg.mxu0
    %1961 = vmatprep.subr.mxu0 0.0
    %v1962 = vand.u32 %v546, 4294901760
    %1963 = vmatpush1.msra.mxu0 %v1962
    %1964 = vmatprep.subr.mxu0 0.0
    %v1965 = vand.u32 %v547, 4294901760
    %1966 = vmatpush1.msra.mxu0 %v1965
    %1967 = vmatprep.subr.mxu0 0.0
    %v1968 = vand.u32 %v548, 4294901760
    %1969 = vmatpush1.msra.mxu0 %v1968
    %1970 = vmatprep.subr.mxu0 0.0
    %v1971 = vand.u32 %v549, 4294901760
    %1972 = vmatpush1.msra.mxu0 %v1971
    %1973 = vmatprep.subr.mxu0 0.0
    %v1974 = vand.u32 %v550, 4294901760
    %1975 = vmatpush1.msra.mxu0 %v1974
    %1976 = vmatprep.subr.mxu0 0.0
    %v1977 = vand.u32 %v551, 4294901760
    %1978 = vmatpush1.msra.mxu0 %v1977
    %1979 = vmatprep.subr.mxu0 0.0
    %v1980 = vand.u32 %v552, 4294901760
    %1981 = vmatpush1.msra.mxu0 %v1980
    %1982 = vmatprep.subr.mxu0 0.0
    %v1983 = vand.u32 %v553, 4294901760
    %1984 = vmatpush1.msra.mxu0 %v1983
    %1985 = vmatprep.subr.mxu0 0.0
    %v1986 = vand.u32 %v554, 4294901760
    %1987 = vmatpush1.msra.mxu0 %v1986
    %1988 = vmatprep.subr.mxu0 0.0
    %v1989 = vand.u32 %v555, 4294901760
    %1990 = vmatpush1.msra.mxu0 %v1989
    %1991 = vmatprep.subr.mxu0 0.0
    %v1992 = vand.u32 %v556, 4294901760
    %1993 = vmatpush1.msra.mxu0 %v1992
    %1994 = vmatprep.subr.mxu0 0.0
    %v1995 = vand.u32 %v557, 4294901760
    %1996 = vmatpush1.msra.mxu0 %v1995
    %1997 = vmatprep.subr.mxu0 0.0
    %v1998 = vand.u32 %v558, 4294901760
    %1999 = vmatpush1.msra.mxu0 %v1998
    %2000 = vmatprep.subr.mxu0 0.0
    %v2001 = vand.u32 %v559, 4294901760
    %2002 = vmatpush1.msra.mxu0 %v2001
    %2003 = vmatprep.subr.mxu0 0.0
    %v2004 = vand.u32 %v560, 4294901760
    %2005 = vmatpush1.msra.mxu0 %v2004
    %2006 = vmatprep.subr.mxu0 0.0
    %v2007 = vand.u32 %v561, 4294901760
    %2008 = vmatpush1.msra.mxu0 %v2007
    %2009 = vmatprep.subr.mxu0 0.0
    %v2010 = vand.u32 %v562, 4294901760
    %2011 = vmatpush1.msra.mxu0 %v2010
    %2012 = vmatprep.subr.mxu0 0.0
    %v2013 = vand.u32 %v563, 4294901760
    %2014 = vmatpush1.msra.mxu0 %v2013
    %2015 = vmatprep.subr.mxu0 0.0
    %v2016 = vand.u32 %v564, 4294901760
    %2017 = vmatpush1.msra.mxu0 %v2016
    %2018 = vmatprep.subr.mxu0 0.0
    %v2019 = vand.u32 %v565, 4294901760
    %2020 = vmatpush1.msra.mxu0 %v2019
    %2021 = vmatprep.subr.mxu0 0.0
    %v2022 = vand.u32 %v566, 4294901760
    %2023 = vmatpush1.msra.mxu0 %v2022
    %2024 = vmatprep.subr.mxu0 0.0
    %v2025 = vand.u32 %v567, 4294901760
    %2026 = vmatpush1.msra.mxu0 %v2025
    %2027 = vmatprep.subr.mxu0 0.0
    %v2028 = vand.u32 %v568, 4294901760
    %2029 = vmatpush1.msra.mxu0 %v2028
    %2030 = vmatprep.subr.mxu0 0.0
    %v2031 = vand.u32 %v569, 4294901760
    %2032 = vmatpush1.msra.mxu0 %v2031
    %2033 = vmatprep.subr.mxu0 0.0
    %v2034 = vand.u32 %v570, 4294901760
    %2035 = vmatpush1.msra.mxu0 %v2034
    %2036 = vmatprep.subr.mxu0 0.0
    %v2037 = vand.u32 %v571, 4294901760
    %2038 = vmatpush1.msra.mxu0 %v2037
    %2039 = vmatprep.subr.mxu0 0.0
    %v2040 = vand.u32 %v572, 4294901760
    %2041 = vmatpush1.msra.mxu0 %v2040
    %2042 = vmatprep.subr.mxu0 0.0
    %v2043 = vand.u32 %v573, 4294901760
    %2044 = vmatpush1.msra.mxu0 %v2043
    %2045 = vmatprep.subr.mxu0 0.0
    %v2046 = vand.u32 %v574, 4294901760
    %2047 = vmatpush1.msra.mxu0 %v2046
    %2048 = vmatprep.subr.mxu0 0.0
    %v2049 = vand.u32 %v575, 4294901760
    %2050 = vmatpush1.msra.mxu0 %v2049
    %2051 = vmatprep.subr.mxu0 0.0
    %v2052 = vand.u32 %v576, 4294901760
    %2053 = vmatpush1.msra.mxu0 %v2052
    %2054 = vmatprep.subr.mxu0 0.0
    %v2055 = vand.u32 %v577, 4294901760
    %2056 = vmatpush1.msra.mxu0 %v2055
    %v2057 = vand.u32 %v511, 4294901760
    %v2058 = vsub.f32 %v511, %v2057
    %v2059 = vand.u32 %v2058, 4294901760
    %2060 = vmatprep.mubr.f32.mxu0 %v2059
    %v2061 = vand.u32 %v510, 4294901760
    %v2062 = vsub.f32 %v510, %v2061
    %v2063 = vand.u32 %v2062, 4294901760
    %2064 = vmatmul.mubr.f32.gmra.mrb[0].mxu0 %v2063
    %v2065 = vpop.f32.mrb[0].mxu0
    %v2066 = vadd.f32 %v1958, %v2065
    %v2067 = vpop.f32.mrb[0].mxu0
    %2068 = vdwg.mxu0
    %2069 = vmatprep.subr.mxu0 0.0
    %v2070 = vand.u32 %v546, 4294901760
    %v2071 = vsub.f32 %v546, %v2070
    %v2072 = vand.u32 %v2071, 4294901760
    %2073 = vmatpush1.msra.mxu0 %v2072
    %2074 = vmatprep.subr.mxu0 0.0
    %v2075 = vand.u32 %v547, 4294901760
    %v2076 = vsub.f32 %v547, %v2075
    %v2077 = vand.u32 %v2076, 4294901760
    %2078 = vmatpush1.msra.mxu0 %v2077
    %2079 = vmatprep.subr.mxu0 0.0
    %v2080 = vand.u32 %v548, 4294901760
    %v2081 = vsub.f32 %v548, %v2080
    %v2082 = vand.u32 %v2081, 4294901760
    %2083 = vmatpush1.msra.mxu0 %v2082
    %2084 = vmatprep.subr.mxu0 0.0
    %v2085 = vand.u32 %v549, 4294901760
    %v2086 = vsub.f32 %v549, %v2085
    %v2087 = vand.u32 %v2086, 4294901760
    %2088 = vmatpush1.msra.mxu0 %v2087
    %2089 = vmatprep.subr.mxu0 0.0
    %v2090 = vand.u32 %v550, 4294901760
    %v2091 = vsub.f32 %v550, %v2090
    %v2092 = vand.u32 %v2091, 4294901760
    %2093 = vmatpush1.msra.mxu0 %v2092
    %2094 = vmatprep.subr.mxu0 0.0
    %v2095 = vand.u32 %v551, 4294901760
    %v2096 = vsub.f32 %v551, %v2095
    %v2097 = vand.u32 %v2096, 4294901760
    %2098 = vmatpush1.msra.mxu0 %v2097
    %2099 = vmatprep.subr.mxu0 0.0
    %v2100 = vand.u32 %v552, 4294901760
    %v2101 = vsub.f32 %v552, %v2100
    %v2102 = vand.u32 %v2101, 4294901760
    %2103 = vmatpush1.msra.mxu0 %v2102
    %2104 = vmatprep.subr.mxu0 0.0
    %v2105 = vand.u32 %v553, 4294901760
    %v2106 = vsub.f32 %v553, %v2105
    %v2107 = vand.u32 %v2106, 4294901760
    %2108 = vmatpush1.msra.mxu0 %v2107
    %2109 = vmatprep.subr.mxu0 0.0
    %v2110 = vand.u32 %v554, 4294901760
    %v2111 = vsub.f32 %v554, %v2110
    %v2112 = vand.u32 %v2111, 4294901760
    %2113 = vmatpush1.msra.mxu0 %v2112
    %2114 = vmatprep.subr.mxu0 0.0
    %v2115 = vand.u32 %v555, 4294901760
    %v2116 = vsub.f32 %v555, %v2115
    %v2117 = vand.u32 %v2116, 4294901760
    %2118 = vmatpush1.msra.mxu0 %v2117
    %2119 = vmatprep.subr.mxu0 0.0
    %v2120 = vand.u32 %v556, 4294901760
    %v2121 = vsub.f32 %v556, %v2120
    %v2122 = vand.u32 %v2121, 4294901760
    %2123 = vmatpush1.msra.mxu0 %v2122
    %2124 = vmatprep.subr.mxu0 0.0
    %v2125 = vand.u32 %v557, 4294901760
    %v2126 = vsub.f32 %v557, %v2125
    %v2127 = vand.u32 %v2126, 4294901760
    %2128 = vmatpush1.msra.mxu0 %v2127
    %2129 = vmatprep.subr.mxu0 0.0
    %v2130 = vand.u32 %v558, 4294901760
    %v2131 = vsub.f32 %v558, %v2130
    %v2132 = vand.u32 %v2131, 4294901760
    %2133 = vmatpush1.msra.mxu0 %v2132
    %2134 = vmatprep.subr.mxu0 0.0
    %v2135 = vand.u32 %v559, 4294901760
    %v2136 = vsub.f32 %v559, %v2135
    %v2137 = vand.u32 %v2136, 4294901760
    %2138 = vmatpush1.msra.mxu0 %v2137
    %2139 = vmatprep.subr.mxu0 0.0
    %v2140 = vand.u32 %v560, 4294901760
    %v2141 = vsub.f32 %v560, %v2140
    %v2142 = vand.u32 %v2141, 4294901760
    %2143 = vmatpush1.msra.mxu0 %v2142
    %2144 = vmatprep.subr.mxu0 0.0
    %v2145 = vand.u32 %v561, 4294901760
    %v2146 = vsub.f32 %v561, %v2145
    %v2147 = vand.u32 %v2146, 4294901760
    %2148 = vmatpush1.msra.mxu0 %v2147
    %2149 = vmatprep.subr.mxu0 0.0
    %v2150 = vand.u32 %v562, 4294901760
    %v2151 = vsub.f32 %v562, %v2150
    %v2152 = vand.u32 %v2151, 4294901760
    %2153 = vmatpush1.msra.mxu0 %v2152
    %2154 = vmatprep.subr.mxu0 0.0
    %v2155 = vand.u32 %v563, 4294901760
    %v2156 = vsub.f32 %v563, %v2155
    %v2157 = vand.u32 %v2156, 4294901760
    %2158 = vmatpush1.msra.mxu0 %v2157
    %2159 = vmatprep.subr.mxu0 0.0
    %v2160 = vand.u32 %v564, 4294901760
    %v2161 = vsub.f32 %v564, %v2160
    %v2162 = vand.u32 %v2161, 4294901760
    %2163 = vmatpush1.msra.mxu0 %v2162
    %2164 = vmatprep.subr.mxu0 0.0
    %v2165 = vand.u32 %v565, 4294901760
    %v2166 = vsub.f32 %v565, %v2165
    %v2167 = vand.u32 %v2166, 4294901760
    %2168 = vmatpush1.msra.mxu0 %v2167
    %2169 = vmatprep.subr.mxu0 0.0
    %v2170 = vand.u32 %v566, 4294901760
    %v2171 = vsub.f32 %v566, %v2170
    %v2172 = vand.u32 %v2171, 4294901760
    %2173 = vmatpush1.msra.mxu0 %v2172
    %2174 = vmatprep.subr.mxu0 0.0
    %v2175 = vand.u32 %v567, 4294901760
    %v2176 = vsub.f32 %v567, %v2175
    %v2177 = vand.u32 %v2176, 4294901760
    %2178 = vmatpush1.msra.mxu0 %v2177
    %2179 = vmatprep.subr.mxu0 0.0
    %v2180 = vand.u32 %v568, 4294901760
    %v2181 = vsub.f32 %v568, %v2180
    %v2182 = vand.u32 %v2181, 4294901760
    %2183 = vmatpush1.msra.mxu0 %v2182
    %2184 = vmatprep.subr.mxu0 0.0
    %v2185 = vand.u32 %v569, 4294901760
    %v2186 = vsub.f32 %v569, %v2185
    %v2187 = vand.u32 %v2186, 4294901760
    %2188 = vmatpush1.msra.mxu0 %v2187
    %2189 = vmatprep.subr.mxu0 0.0
    %v2190 = vand.u32 %v570, 4294901760
    %v2191 = vsub.f32 %v570, %v2190
    %v2192 = vand.u32 %v2191, 4294901760
    %2193 = vmatpush1.msra.mxu0 %v2192
    %2194 = vmatprep.subr.mxu0 0.0
    %v2195 = vand.u32 %v571, 4294901760
    %v2196 = vsub.f32 %v571, %v2195
    %v2197 = vand.u32 %v2196, 4294901760
    %2198 = vmatpush1.msra.mxu0 %v2197
    %2199 = vmatprep.subr.mxu0 0.0
    %v2200 = vand.u32 %v572, 4294901760
    %v2201 = vsub.f32 %v572, %v2200
    %v2202 = vand.u32 %v2201, 4294901760
    %2203 = vmatpush1.msra.mxu0 %v2202
    %2204 = vmatprep.subr.mxu0 0.0
    %v2205 = vand.u32 %v573, 4294901760
    %v2206 = vsub.f32 %v573, %v2205
    %v2207 = vand.u32 %v2206, 4294901760
    %2208 = vmatpush1.msra.mxu0 %v2207
    %2209 = vmatprep.subr.mxu0 0.0
    %v2210 = vand.u32 %v574, 4294901760
    %v2211 = vsub.f32 %v574, %v2210
    %v2212 = vand.u32 %v2211, 4294901760
    %2213 = vmatpush1.msra.mxu0 %v2212
    %2214 = vmatprep.subr.mxu0 0.0
    %v2215 = vand.u32 %v575, 4294901760
    %v2216 = vsub.f32 %v575, %v2215
    %v2217 = vand.u32 %v2216, 4294901760
    %2218 = vmatpush1.msra.mxu0 %v2217
    %2219 = vmatprep.subr.mxu0 0.0
    %v2220 = vand.u32 %v576, 4294901760
    %v2221 = vsub.f32 %v576, %v2220
    %v2222 = vand.u32 %v2221, 4294901760
    %2223 = vmatpush1.msra.mxu0 %v2222
    %2224 = vmatprep.subr.mxu0 0.0
    %v2225 = vand.u32 %v577, 4294901760
    %v2226 = vsub.f32 %v577, %v2225
    %v2227 = vand.u32 %v2226, 4294901760
    %2228 = vmatpush1.msra.mxu0 %v2227
    %v2229 = vand.u32 %v511, 4294901760
    %2230 = vmatprep.mubr.f32.mxu0 %v2229
    %v2231 = vand.u32 %v510, 4294901760
    %2232 = vmatmul.mubr.f32.gmra.mrb[0].mxu0 %v2231
    %v2233 = vpop.f32.mrb[0].mxu0
    %v2234 = vadd.f32 %v2066, %v2233
    %v2235 = vpop.f32.mrb[0].mxu0
    %2236 = vdwg.mxu0
    %2237 = vmatprep.subr.mxu0 0.0
    %v2238 = vand.u32 %v546, 4294901760
    %2239 = vmatpush1.msra.mxu0 %v2238
    %2240 = vmatprep.subr.mxu0 0.0
    %v2241 = vand.u32 %v547, 4294901760
    %2242 = vmatpush1.msra.mxu0 %v2241
    %2243 = vmatprep.subr.mxu0 0.0
    %v2244 = vand.u32 %v548, 4294901760
    %2245 = vmatpush1.msra.mxu0 %v2244
    %2246 = vmatprep.subr.mxu0 0.0
    %v2247 = vand.u32 %v549, 4294901760
    %2248 = vmatpush1.msra.mxu0 %v2247
    %2249 = vmatprep.subr.mxu0 0.0
    %v2250 = vand.u32 %v550, 4294901760
    %2251 = vmatpush1.msra.mxu0 %v2250
    %2252 = vmatprep.subr.mxu0 0.0
    %v2253 = vand.u32 %v551, 4294901760
    %2254 = vmatpush1.msra.mxu0 %v2253
    %2255 = vmatprep.subr.mxu0 0.0
    %v2256 = vand.u32 %v552, 4294901760
    %2257 = vmatpush1.msra.mxu0 %v2256
    %2258 = vmatprep.subr.mxu0 0.0
    %v2259 = vand.u32 %v553, 4294901760
    %2260 = vmatpush1.msra.mxu0 %v2259
    %2261 = vmatprep.subr.mxu0 0.0
    %v2262 = vand.u32 %v554, 4294901760
    %2263 = vmatpush1.msra.mxu0 %v2262
    %2264 = vmatprep.subr.mxu0 0.0
    %v2265 = vand.u32 %v555, 4294901760
    %2266 = vmatpush1.msra.mxu0 %v2265
    %2267 = vmatprep.subr.mxu0 0.0
    %v2268 = vand.u32 %v556, 4294901760
    %2269 = vmatpush1.msra.mxu0 %v2268
    %2270 = vmatprep.subr.mxu0 0.0
    %v2271 = vand.u32 %v557, 4294901760
    %2272 = vmatpush1.msra.mxu0 %v2271
    %2273 = vmatprep.subr.mxu0 0.0
    %v2274 = vand.u32 %v558, 4294901760
    %2275 = vmatpush1.msra.mxu0 %v2274
    %2276 = vmatprep.subr.mxu0 0.0
    %v2277 = vand.u32 %v559, 4294901760
    %2278 = vmatpush1.msra.mxu0 %v2277
    %2279 = vmatprep.subr.mxu0 0.0
    %v2280 = vand.u32 %v560, 4294901760
    %2281 = vmatpush1.msra.mxu0 %v2280
    %2282 = vmatprep.subr.mxu0 0.0
    %v2283 = vand.u32 %v561, 4294901760
    %2284 = vmatpush1.msra.mxu0 %v2283
    %2285 = vmatprep.subr.mxu0 0.0
    %v2286 = vand.u32 %v562, 4294901760
    %2287 = vmatpush1.msra.mxu0 %v2286
    %2288 = vmatprep.subr.mxu0 0.0
    %v2289 = vand.u32 %v563, 4294901760
    %2290 = vmatpush1.msra.mxu0 %v2289
    %2291 = vmatprep.subr.mxu0 0.0
    %v2292 = vand.u32 %v564, 4294901760
    %2293 = vmatpush1.msra.mxu0 %v2292
    %2294 = vmatprep.subr.mxu0 0.0
    %v2295 = vand.u32 %v565, 4294901760
    %2296 = vmatpush1.msra.mxu0 %v2295
    %2297 = vmatprep.subr.mxu0 0.0
    %v2298 = vand.u32 %v566, 4294901760
    %2299 = vmatpush1.msra.mxu0 %v2298
    %2300 = vmatprep.subr.mxu0 0.0
    %v2301 = vand.u32 %v567, 4294901760
    %2302 = vmatpush1.msra.mxu0 %v2301
    %2303 = vmatprep.subr.mxu0 0.0
    %v2304 = vand.u32 %v568, 4294901760
    %2305 = vmatpush1.msra.mxu0 %v2304
    %2306 = vmatprep.subr.mxu0 0.0
    %v2307 = vand.u32 %v569, 4294901760
    %2308 = vmatpush1.msra.mxu0 %v2307
    %2309 = vmatprep.subr.mxu0 0.0
    %v2310 = vand.u32 %v570, 4294901760
    %2311 = vmatpush1.msra.mxu0 %v2310
    %2312 = vmatprep.subr.mxu0 0.0
    %v2313 = vand.u32 %v571, 4294901760
    %2314 = vmatpush1.msra.mxu0 %v2313
    %2315 = vmatprep.subr.mxu0 0.0
    %v2316 = vand.u32 %v572, 4294901760
    %2317 = vmatpush1.msra.mxu0 %v2316
    %2318 = vmatprep.subr.mxu0 0.0
    %v2319 = vand.u32 %v573, 4294901760
    %2320 = vmatpush1.msra.mxu0 %v2319
    %2321 = vmatprep.subr.mxu0 0.0
    %v2322 = vand.u32 %v574, 4294901760
    %2323 = vmatpush1.msra.mxu0 %v2322
    %2324 = vmatprep.subr.mxu0 0.0
    %v2325 = vand.u32 %v575, 4294901760
    %2326 = vmatpush1.msra.mxu0 %v2325
    %2327 = vmatprep.subr.mxu0 0.0
    %v2328 = vand.u32 %v576, 4294901760
    %2329 = vmatpush1.msra.mxu0 %v2328
    %2330 = vmatprep.subr.mxu0 0.0
    %v2331 = vand.u32 %v577, 4294901760
    %2332 = vmatpush1.msra.mxu0 %v2331
    %v2333 = vand.u32 %v511, 4294901760
    %2334 = vmatprep.mubr.f32.mxu0 %v2333
    %v2335 = vand.u32 %v510, 4294901760
    %2336 = vmatmul.mubr.f32.gmra.mrb[0].mxu0 %v2335
    %v2337 = vpop.f32.mrb[0].mxu0
    %v2338 = vadd.f32 %v2234, %v2337
    %v2339 = vpop.f32.mrb[0].mxu0
    %2340 = vdwg.mxu0
    %2341 = vmatprep.subr.mxu0 0.0
    %v2342 = vand.u32 %v578, 4294901760
    %2343 = vmatpush1.msra.mxu0 %v2342
    %2344 = vmatprep.subr.mxu0 0.0
    %v2345 = vand.u32 %v579, 4294901760
    %2346 = vmatpush1.msra.mxu0 %v2345
    %2347 = vmatprep.subr.mxu0 0.0
    %v2348 = vand.u32 %v580, 4294901760
    %2349 = vmatpush1.msra.mxu0 %v2348
    %2350 = vmatprep.subr.mxu0 0.0
    %v2351 = vand.u32 %v581, 4294901760
    %2352 = vmatpush1.msra.mxu0 %v2351
    %2353 = vmatprep.subr.mxu0 0.0
    %v2354 = vand.u32 %v582, 4294901760
    %2355 = vmatpush1.msra.mxu0 %v2354
    %2356 = vmatprep.subr.mxu0 0.0
    %v2357 = vand.u32 %v583, 4294901760
    %2358 = vmatpush1.msra.mxu0 %v2357
    %2359 = vmatprep.subr.mxu0 0.0
    %v2360 = vand.u32 %v584, 4294901760
    %2361 = vmatpush1.msra.mxu0 %v2360
    %2362 = vmatprep.subr.mxu0 0.0
    %v2363 = vand.u32 %v585, 4294901760
    %2364 = vmatpush1.msra.mxu0 %v2363
    %2365 = vmatprep.subr.mxu0 0.0
    %v2366 = vand.u32 %v586, 4294901760
    %2367 = vmatpush1.msra.mxu0 %v2366
    %2368 = vmatprep.subr.mxu0 0.0
    %v2369 = vand.u32 %v587, 4294901760
    %2370 = vmatpush1.msra.mxu0 %v2369
    %2371 = vmatprep.subr.mxu0 0.0
    %v2372 = vand.u32 %v588, 4294901760
    %2373 = vmatpush1.msra.mxu0 %v2372
    %2374 = vmatprep.subr.mxu0 0.0
    %v2375 = vand.u32 %v589, 4294901760
    %2376 = vmatpush1.msra.mxu0 %v2375
    %2377 = vmatprep.subr.mxu0 0.0
    %v2378 = vand.u32 %v590, 4294901760
    %2379 = vmatpush1.msra.mxu0 %v2378
    %2380 = vmatprep.subr.mxu0 0.0
    %v2381 = vand.u32 %v591, 4294901760
    %2382 = vmatpush1.msra.mxu0 %v2381
    %2383 = vmatprep.subr.mxu0 0.0
    %v2384 = vand.u32 %v592, 4294901760
    %2385 = vmatpush1.msra.mxu0 %v2384
    %2386 = vmatprep.subr.mxu0 0.0
    %v2387 = vand.u32 %v593, 4294901760
    %2388 = vmatpush1.msra.mxu0 %v2387
    %2389 = vmatprep.subr.mxu0 0.0
    %v2390 = vand.u32 %v594, 4294901760
    %2391 = vmatpush1.msra.mxu0 %v2390
    %2392 = vmatprep.subr.mxu0 0.0
    %v2393 = vand.u32 %v595, 4294901760
    %2394 = vmatpush1.msra.mxu0 %v2393
    %2395 = vmatprep.subr.mxu0 0.0
    %v2396 = vand.u32 %v596, 4294901760
    %2397 = vmatpush1.msra.mxu0 %v2396
    %2398 = vmatprep.subr.mxu0 0.0
    %v2399 = vand.u32 %v597, 4294901760
    %2400 = vmatpush1.msra.mxu0 %v2399
    %2401 = vmatprep.subr.mxu0 0.0
    %v2402 = vand.u32 %v598, 4294901760
    %2403 = vmatpush1.msra.mxu0 %v2402
    %2404 = vmatprep.subr.mxu0 0.0
    %v2405 = vand.u32 %v599, 4294901760
    %2406 = vmatpush1.msra.mxu0 %v2405
    %2407 = vmatprep.subr.mxu0 0.0
    %v2408 = vand.u32 %v600, 4294901760
    %2409 = vmatpush1.msra.mxu0 %v2408
    %2410 = vmatprep.subr.mxu0 0.0
    %v2411 = vand.u32 %v601, 4294901760
    %2412 = vmatpush1.msra.mxu0 %v2411
    %2413 = vmatprep.subr.mxu0 0.0
    %v2414 = vand.u32 %v602, 4294901760
    %2415 = vmatpush1.msra.mxu0 %v2414
    %2416 = vmatprep.subr.mxu0 0.0
    %v2417 = vand.u32 %v603, 4294901760
    %2418 = vmatpush1.msra.mxu0 %v2417
    %2419 = vmatprep.subr.mxu0 0.0
    %v2420 = vand.u32 %v604, 4294901760
    %2421 = vmatpush1.msra.mxu0 %v2420
    %2422 = vmatprep.subr.mxu0 0.0
    %v2423 = vand.u32 %v605, 4294901760
    %2424 = vmatpush1.msra.mxu0 %v2423
    %2425 = vmatprep.subr.mxu0 0.0
    %v2426 = vand.u32 %v606, 4294901760
    %2427 = vmatpush1.msra.mxu0 %v2426
    %2428 = vmatprep.subr.mxu0 0.0
    %v2429 = vand.u32 %v607, 4294901760
    %2430 = vmatpush1.msra.mxu0 %v2429
    %2431 = vmatprep.subr.mxu0 0.0
    %v2432 = vand.u32 %v608, 4294901760
    %2433 = vmatpush1.msra.mxu0 %v2432
    %2434 = vmatprep.subr.mxu0 0.0
    %v2435 = vand.u32 %v609, 4294901760
    %2436 = vmatpush1.msra.mxu0 %v2435
    %v2437 = vand.u32 %v513, 4294901760
    %v2438 = vsub.f32 %v513, %v2437
    %v2439 = vand.u32 %v2438, 4294901760
    %v2440 = vsub.f32 %v2438, %v2439
    %v2441 = vand.u32 %v2440, 4294901760
    %2442 = vmatprep.mubr.f32.mxu0 %v2441
    %v2443 = vand.u32 %v512, 4294901760
    %v2444 = vsub.f32 %v512, %v2443
    %v2445 = vand.u32 %v2444, 4294901760
    %v2446 = vsub.f32 %v2444, %v2445
    %v2447 = vand.u32 %v2446, 4294901760
    %2448 = vmatmul.mubr.f32.gmra.mrb[0].mxu0 %v2447
    %v2449 = vpop.f32.mrb[0].mxu0
    %v2450 = vadd.f32 %v2338, %v2449
    %v2451 = vpop.f32.mrb[0].mxu0
    %2452 = vdwg.mxu0
    %2453 = vmatprep.subr.mxu0 0.0
    %v2454 = vand.u32 %v578, 4294901760
    %v2455 = vsub.f32 %v578, %v2454
    %v2456 = vand.u32 %v2455, 4294901760
    %v2457 = vsub.f32 %v2455, %v2456
    %v2458 = vand.u32 %v2457, 4294901760
    %2459 = vmatpush1.msra.mxu0 %v2458
    %2460 = vmatprep.subr.mxu0 0.0
    %v2461 = vand.u32 %v579, 4294901760
    %v2462 = vsub.f32 %v579, %v2461
    %v2463 = vand.u32 %v2462, 4294901760
    %v2464 = vsub.f32 %v2462, %v2463
    %v2465 = vand.u32 %v2464, 4294901760
    %2466 = vmatpush1.msra.mxu0 %v2465
    %2467 = vmatprep.subr.mxu0 0.0
    %v2468 = vand.u32 %v580, 4294901760
    %v2469 = vsub.f32 %v580, %v2468
    %v2470 = vand.u32 %v2469, 4294901760
    %v2471 = vsub.f32 %v2469, %v2470
    %v2472 = vand.u32 %v2471, 4294901760
    %2473 = vmatpush1.msra.mxu0 %v2472
    %2474 = vmatprep.subr.mxu0 0.0
    %v2475 = vand.u32 %v581, 4294901760
    %v2476 = vsub.f32 %v581, %v2475
    %v2477 = vand.u32 %v2476, 4294901760
    %v2478 = vsub.f32 %v2476, %v2477
    %v2479 = vand.u32 %v2478, 4294901760
    %2480 = vmatpush1.msra.mxu0 %v2479
    %2481 = vmatprep.subr.mxu0 0.0
    %v2482 = vand.u32 %v582, 4294901760
    %v2483 = vsub.f32 %v582, %v2482
    %v2484 = vand.u32 %v2483, 4294901760
    %v2485 = vsub.f32 %v2483, %v2484
    %v2486 = vand.u32 %v2485, 4294901760
    %2487 = vmatpush1.msra.mxu0 %v2486
    %2488 = vmatprep.subr.mxu0 0.0
    %v2489 = vand.u32 %v583, 4294901760
    %v2490 = vsub.f32 %v583, %v2489
    %v2491 = vand.u32 %v2490, 4294901760
    %v2492 = vsub.f32 %v2490, %v2491
    %v2493 = vand.u32 %v2492, 4294901760
    %2494 = vmatpush1.msra.mxu0 %v2493
    %2495 = vmatprep.subr.mxu0 0.0
    %v2496 = vand.u32 %v584, 4294901760
    %v2497 = vsub.f32 %v584, %v2496
    %v2498 = vand.u32 %v2497, 4294901760
    %v2499 = vsub.f32 %v2497, %v2498
    %v2500 = vand.u32 %v2499, 4294901760
    %2501 = vmatpush1.msra.mxu0 %v2500
    %2502 = vmatprep.subr.mxu0 0.0
    %v2503 = vand.u32 %v585, 4294901760
    %v2504 = vsub.f32 %v585, %v2503
    %v2505 = vand.u32 %v2504, 4294901760
    %v2506 = vsub.f32 %v2504, %v2505
    %v2507 = vand.u32 %v2506, 4294901760
    %2508 = vmatpush1.msra.mxu0 %v2507
    %2509 = vmatprep.subr.mxu0 0.0
    %v2510 = vand.u32 %v586, 4294901760
    %v2511 = vsub.f32 %v586, %v2510
    %v2512 = vand.u32 %v2511, 4294901760
    %v2513 = vsub.f32 %v2511, %v2512
    %v2514 = vand.u32 %v2513, 4294901760
    %2515 = vmatpush1.msra.mxu0 %v2514
    %2516 = vmatprep.subr.mxu0 0.0
    %v2517 = vand.u32 %v587, 4294901760
    %v2518 = vsub.f32 %v587, %v2517
    %v2519 = vand.u32 %v2518, 4294901760
    %v2520 = vsub.f32 %v2518, %v2519
    %v2521 = vand.u32 %v2520, 4294901760
    %2522 = vmatpush1.msra.mxu0 %v2521
    %2523 = vmatprep.subr.mxu0 0.0
    %v2524 = vand.u32 %v588, 4294901760
    %v2525 = vsub.f32 %v588, %v2524
    %v2526 = vand.u32 %v2525, 4294901760
    %v2527 = vsub.f32 %v2525, %v2526
    %v2528 = vand.u32 %v2527, 4294901760
    %2529 = vmatpush1.msra.mxu0 %v2528
    %2530 = vmatprep.subr.mxu0 0.0
    %v2531 = vand.u32 %v589, 4294901760
    %v2532 = vsub.f32 %v589, %v2531
    %v2533 = vand.u32 %v2532, 4294901760
    %v2534 = vsub.f32 %v2532, %v2533
    %v2535 = vand.u32 %v2534, 4294901760
    %2536 = vmatpush1.msra.mxu0 %v2535
    %2537 = vmatprep.subr.mxu0 0.0
    %v2538 = vand.u32 %v590, 4294901760
    %v2539 = vsub.f32 %v590, %v2538
    %v2540 = vand.u32 %v2539, 4294901760
    %v2541 = vsub.f32 %v2539, %v2540
    %v2542 = vand.u32 %v2541, 4294901760
    %2543 = vmatpush1.msra.mxu0 %v2542
    %2544 = vmatprep.subr.mxu0 0.0
    %v2545 = vand.u32 %v591, 4294901760
    %v2546 = vsub.f32 %v591, %v2545
    %v2547 = vand.u32 %v2546, 4294901760
    %v2548 = vsub.f32 %v2546, %v2547
    %v2549 = vand.u32 %v2548, 4294901760
    %2550 = vmatpush1.msra.mxu0 %v2549
    %2551 = vmatprep.subr.mxu0 0.0
    %v2552 = vand.u32 %v592, 4294901760
    %v2553 = vsub.f32 %v592, %v2552
    %v2554 = vand.u32 %v2553, 4294901760
    %v2555 = vsub.f32 %v2553, %v2554
    %v2556 = vand.u32 %v2555, 4294901760
    %2557 = vmatpush1.msra.mxu0 %v2556
    %2558 = vmatprep.subr.mxu0 0.0
    %v2559 = vand.u32 %v593, 4294901760
    %v2560 = vsub.f32 %v593, %v2559
    %v2561 = vand.u32 %v2560, 4294901760
    %v2562 = vsub.f32 %v2560, %v2561
    %v2563 = vand.u32 %v2562, 4294901760
    %2564 = vmatpush1.msra.mxu0 %v2563
    %2565 = vmatprep.subr.mxu0 0.0
    %v2566 = vand.u32 %v594, 4294901760
    %v2567 = vsub.f32 %v594, %v2566
    %v2568 = vand.u32 %v2567, 4294901760
    %v2569 = vsub.f32 %v2567, %v2568
    %v2570 = vand.u32 %v2569, 4294901760
    %2571 = vmatpush1.msra.mxu0 %v2570
    %2572 = vmatprep.subr.mxu0 0.0
    %v2573 = vand.u32 %v595, 4294901760
    %v2574 = vsub.f32 %v595, %v2573
    %v2575 = vand.u32 %v2574, 4294901760
    %v2576 = vsub.f32 %v2574, %v2575
    %v2577 = vand.u32 %v2576, 4294901760
    %2578 = vmatpush1.msra.mxu0 %v2577
    %2579 = vmatprep.subr.mxu0 0.0
    %v2580 = vand.u32 %v596, 4294901760
    %v2581 = vsub.f32 %v596, %v2580
    %v2582 = vand.u32 %v2581, 4294901760
    %v2583 = vsub.f32 %v2581, %v2582
    %v2584 = vand.u32 %v2583, 4294901760
    %2585 = vmatpush1.msra.mxu0 %v2584
    %2586 = vmatprep.subr.mxu0 0.0
    %v2587 = vand.u32 %v597, 4294901760
    %v2588 = vsub.f32 %v597, %v2587
    %v2589 = vand.u32 %v2588, 4294901760
    %v2590 = vsub.f32 %v2588, %v2589
    %v2591 = vand.u32 %v2590, 4294901760
    %2592 = vmatpush1.msra.mxu0 %v2591
    %2593 = vmatprep.subr.mxu0 0.0
    %v2594 = vand.u32 %v598, 4294901760
    %v2595 = vsub.f32 %v598, %v2594
    %v2596 = vand.u32 %v2595, 4294901760
    %v2597 = vsub.f32 %v2595, %v2596
    %v2598 = vand.u32 %v2597, 4294901760
    %2599 = vmatpush1.msra.mxu0 %v2598
    %2600 = vmatprep.subr.mxu0 0.0
    %v2601 = vand.u32 %v599, 4294901760
    %v2602 = vsub.f32 %v599, %v2601
    %v2603 = vand.u32 %v2602, 4294901760
    %v2604 = vsub.f32 %v2602, %v2603
    %v2605 = vand.u32 %v2604, 4294901760
    %2606 = vmatpush1.msra.mxu0 %v2605
    %2607 = vmatprep.subr.mxu0 0.0
    %v2608 = vand.u32 %v600, 4294901760
    %v2609 = vsub.f32 %v600, %v2608
    %v2610 = vand.u32 %v2609, 4294901760
    %v2611 = vsub.f32 %v2609, %v2610
    %v2612 = vand.u32 %v2611, 4294901760
    %2613 = vmatpush1.msra.mxu0 %v2612
    %2614 = vmatprep.subr.mxu0 0.0
    %v2615 = vand.u32 %v601, 4294901760
    %v2616 = vsub.f32 %v601, %v2615
    %v2617 = vand.u32 %v2616, 4294901760
    %v2618 = vsub.f32 %v2616, %v2617
    %v2619 = vand.u32 %v2618, 4294901760
    %2620 = vmatpush1.msra.mxu0 %v2619
    %2621 = vmatprep.subr.mxu0 0.0
    %v2622 = vand.u32 %v602, 4294901760
    %v2623 = vsub.f32 %v602, %v2622
    %v2624 = vand.u32 %v2623, 4294901760
    %v2625 = vsub.f32 %v2623, %v2624
    %v2626 = vand.u32 %v2625, 4294901760
    %2627 = vmatpush1.msra.mxu0 %v2626
    %2628 = vmatprep.subr.mxu0 0.0
    %v2629 = vand.u32 %v603, 4294901760
    %v2630 = vsub.f32 %v603, %v2629
    %v2631 = vand.u32 %v2630, 4294901760
    %v2632 = vsub.f32 %v2630, %v2631
    %v2633 = vand.u32 %v2632, 4294901760
    %2634 = vmatpush1.msra.mxu0 %v2633
    %2635 = vmatprep.subr.mxu0 0.0
    %v2636 = vand.u32 %v604, 4294901760
    %v2637 = vsub.f32 %v604, %v2636
    %v2638 = vand.u32 %v2637, 4294901760
    %v2639 = vsub.f32 %v2637, %v2638
    %v2640 = vand.u32 %v2639, 4294901760
    %2641 = vmatpush1.msra.mxu0 %v2640
    %2642 = vmatprep.subr.mxu0 0.0
    %v2643 = vand.u32 %v605, 4294901760
    %v2644 = vsub.f32 %v605, %v2643
    %v2645 = vand.u32 %v2644, 4294901760
    %v2646 = vsub.f32 %v2644, %v2645
    %v2647 = vand.u32 %v2646, 4294901760
    %2648 = vmatpush1.msra.mxu0 %v2647
    %2649 = vmatprep.subr.mxu0 0.0
    %v2650 = vand.u32 %v606, 4294901760
    %v2651 = vsub.f32 %v606, %v2650
    %v2652 = vand.u32 %v2651, 4294901760
    %v2653 = vsub.f32 %v2651, %v2652
    %v2654 = vand.u32 %v2653, 4294901760
    %2655 = vmatpush1.msra.mxu0 %v2654
    %2656 = vmatprep.subr.mxu0 0.0
    %v2657 = vand.u32 %v607, 4294901760
    %v2658 = vsub.f32 %v607, %v2657
    %v2659 = vand.u32 %v2658, 4294901760
    %v2660 = vsub.f32 %v2658, %v2659
    %v2661 = vand.u32 %v2660, 4294901760
    %2662 = vmatpush1.msra.mxu0 %v2661
    %2663 = vmatprep.subr.mxu0 0.0
    %v2664 = vand.u32 %v608, 4294901760
    %v2665 = vsub.f32 %v608, %v2664
    %v2666 = vand.u32 %v2665, 4294901760
    %v2667 = vsub.f32 %v2665, %v2666
    %v2668 = vand.u32 %v2667, 4294901760
    %2669 = vmatpush1.msra.mxu0 %v2668
    %2670 = vmatprep.subr.mxu0 0.0
    %v2671 = vand.u32 %v609, 4294901760
    %v2672 = vsub.f32 %v609, %v2671
    %v2673 = vand.u32 %v2672, 4294901760
    %v2674 = vsub.f32 %v2672, %v2673
    %v2675 = vand.u32 %v2674, 4294901760
    %2676 = vmatpush1.msra.mxu0 %v2675
    %v2677 = vand.u32 %v513, 4294901760
    %2678 = vmatprep.mubr.f32.mxu0 %v2677
    %v2679 = vand.u32 %v512, 4294901760
    %2680 = vmatmul.mubr.f32.gmra.mrb[0].mxu0 %v2679
    %v2681 = vpop.f32.mrb[0].mxu0
    %v2682 = vadd.f32 %v2450, %v2681
    %v2683 = vpop.f32.mrb[0].mxu0
    %2684 = vdwg.mxu0
    %2685 = vmatprep.subr.mxu0 0.0
    %v2686 = vand.u32 %v578, 4294901760
    %v2687 = vsub.f32 %v578, %v2686
    %2688 = vmatpush1.msra.mxu0 %v2687
    %2689 = vmatprep.subr.mxu0 0.0
    %v2690 = vand.u32 %v579, 4294901760
    %v2691 = vsub.f32 %v579, %v2690
    %2692 = vmatpush1.msra.mxu0 %v2691
    %2693 = vmatprep.subr.mxu0 0.0
    %v2694 = vand.u32 %v580, 4294901760
    %v2695 = vsub.f32 %v580, %v2694
    %2696 = vmatpush1.msra.mxu0 %v2695
    %2697 = vmatprep.subr.mxu0 0.0
    %v2698 = vand.u32 %v581, 4294901760
    %v2699 = vsub.f32 %v581, %v2698
    %2700 = vmatpush1.msra.mxu0 %v2699
    %2701 = vmatprep.subr.mxu0 0.0
    %v2702 = vand.u32 %v582, 4294901760
    %v2703 = vsub.f32 %v582, %v2702
    %2704 = vmatpush1.msra.mxu0 %v2703
    %2705 = vmatprep.subr.mxu0 0.0
    %v2706 = vand.u32 %v583, 4294901760
    %v2707 = vsub.f32 %v583, %v2706
    %2708 = vmatpush1.msra.mxu0 %v2707
    %2709 = vmatprep.subr.mxu0 0.0
    %v2710 = vand.u32 %v584, 4294901760
    %v2711 = vsub.f32 %v584, %v2710
    %2712 = vmatpush1.msra.mxu0 %v2711
    %2713 = vmatprep.subr.mxu0 0.0
    %v2714 = vand.u32 %v585, 4294901760
    %v2715 = vsub.f32 %v585, %v2714
    %2716 = vmatpush1.msra.mxu0 %v2715
    %2717 = vmatprep.subr.mxu0 0.0
    %v2718 = vand.u32 %v586, 4294901760
    %v2719 = vsub.f32 %v586, %v2718
    %2720 = vmatpush1.msra.mxu0 %v2719
    %2721 = vmatprep.subr.mxu0 0.0
    %v2722 = vand.u32 %v587, 4294901760
    %v2723 = vsub.f32 %v587, %v2722
    %2724 = vmatpush1.msra.mxu0 %v2723
    %2725 = vmatprep.subr.mxu0 0.0
    %v2726 = vand.u32 %v588, 4294901760
    %v2727 = vsub.f32 %v588, %v2726
    %2728 = vmatpush1.msra.mxu0 %v2727
    %2729 = vmatprep.subr.mxu0 0.0
    %v2730 = vand.u32 %v589, 4294901760
    %v2731 = vsub.f32 %v589, %v2730
    %2732 = vmatpush1.msra.mxu0 %v2731
    %2733 = vmatprep.subr.mxu0 0.0
    %v2734 = vand.u32 %v590, 4294901760
    %v2735 = vsub.f32 %v590, %v2734
    %2736 = vmatpush1.msra.mxu0 %v2735
    %2737 = vmatprep.subr.mxu0 0.0
    %v2738 = vand.u32 %v591, 4294901760
    %v2739 = vsub.f32 %v591, %v2738
    %2740 = vmatpush1.msra.mxu0 %v2739
    %2741 = vmatprep.subr.mxu0 0.0
    %v2742 = vand.u32 %v592, 4294901760
    %v2743 = vsub.f32 %v592, %v2742
    %2744 = vmatpush1.msra.mxu0 %v2743
    %2745 = vmatprep.subr.mxu0 0.0
    %v2746 = vand.u32 %v593, 4294901760
    %v2747 = vsub.f32 %v593, %v2746
    %2748 = vmatpush1.msra.mxu0 %v2747
    %2749 = vmatprep.subr.mxu0 0.0
    %v2750 = vand.u32 %v594, 4294901760
    %v2751 = vsub.f32 %v594, %v2750
    %2752 = vmatpush1.msra.mxu0 %v2751
    %2753 = vmatprep.subr.mxu0 0.0
    %v2754 = vand.u32 %v595, 4294901760
    %v2755 = vsub.f32 %v595, %v2754
    %2756 = vmatpush1.msra.mxu0 %v2755
    %2757 = vmatprep.subr.mxu0 0.0
    %v2758 = vand.u32 %v596, 4294901760
    %v2759 = vsub.f32 %v596, %v2758
    %2760 = vmatpush1.msra.mxu0 %v2759
    %2761 = vmatprep.subr.mxu0 0.0
    %v2762 = vand.u32 %v597, 4294901760
    %v2763 = vsub.f32 %v597, %v2762
    %2764 = vmatpush1.msra.mxu0 %v2763
    %2765 = vmatprep.subr.mxu0 0.0
    %v2766 = vand.u32 %v598, 4294901760
    %v2767 = vsub.f32 %v598, %v2766
    %2768 = vmatpush1.msra.mxu0 %v2767
    %2769 = vmatprep.subr.mxu0 0.0
    %v2770 = vand.u32 %v599, 4294901760
    %v2771 = vsub.f32 %v599, %v2770
    %2772 = vmatpush1.msra.mxu0 %v2771
    %2773 = vmatprep.subr.mxu0 0.0
    %v2774 = vand.u32 %v600, 4294901760
    %v2775 = vsub.f32 %v600, %v2774
    %2776 = vmatpush1.msra.mxu0 %v2775
    %2777 = vmatprep.subr.mxu0 0.0
    %v2778 = vand.u32 %v601, 4294901760
    %v2779 = vsub.f32 %v601, %v2778
    %2780 = vmatpush1.msra.mxu0 %v2779
    %2781 = vmatprep.subr.mxu0 0.0
    %v2782 = vand.u32 %v602, 4294901760
    %v2783 = vsub.f32 %v602, %v2782
    %2784 = vmatpush1.msra.mxu0 %v2783
    %2785 = vmatprep.subr.mxu0 0.0
    %v2786 = vand.u32 %v603, 4294901760
    %v2787 = vsub.f32 %v603, %v2786
    %2788 = vmatpush1.msra.mxu0 %v2787
    %2789 = vmatprep.subr.mxu0 0.0
    %v2790 = vand.u32 %v604, 4294901760
    %v2791 = vsub.f32 %v604, %v2790
    %2792 = vmatpush1.msra.mxu0 %v2791
    %2793 = vmatprep.subr.mxu0 0.0
    %v2794 = vand.u32 %v605, 4294901760
    %v2795 = vsub.f32 %v605, %v2794
    %2796 = vmatpush1.msra.mxu0 %v2795
    %2797 = vmatprep.subr.mxu0 0.0
    %v2798 = vand.u32 %v606, 4294901760
    %v2799 = vsub.f32 %v606, %v2798
    %2800 = vmatpush1.msra.mxu0 %v2799
    %2801 = vmatprep.subr.mxu0 0.0
    %v2802 = vand.u32 %v607, 4294901760
    %v2803 = vsub.f32 %v607, %v2802
    %2804 = vmatpush1.msra.mxu0 %v2803
    %2805 = vmatprep.subr.mxu0 0.0
    %v2806 = vand.u32 %v608, 4294901760
    %v2807 = vsub.f32 %v608, %v2806
    %2808 = vmatpush1.msra.mxu0 %v2807
    %2809 = vmatprep.subr.mxu0 0.0
    %v2810 = vand.u32 %v609, 4294901760
    %v2811 = vsub.f32 %v609, %v2810
    %2812 = vmatpush1.msra.mxu0 %v2811
    %v2813 = vand.u32 %v513, 4294901760
    %v2814 = vsub.f32 %v513, %v2813
    %2815 = vmatprep.mubr.f32.mxu0 %v2814
    %v2816 = vand.u32 %v512, 4294901760
    %v2817 = vsub.f32 %v512, %v2816
    %2818 = vmatmul.mubr.f32.gmra.mrb[0].mxu0 %v2817
    %v2819 = vpop.f32.mrb[0].mxu0
    %v2820 = vadd.f32 %v2682, %v2819
    %v2821 = vpop.f32.mrb[0].mxu0
    %2822 = vdwg.mxu0
    %2823 = vmatprep.subr.mxu0 0.0
    %v2824 = vand.u32 %v578, 4294901760
    %2825 = vmatpush1.msra.mxu0 %v2824
    %2826 = vmatprep.subr.mxu0 0.0
    %v2827 = vand.u32 %v579, 4294901760
    %2828 = vmatpush1.msra.mxu0 %v2827
    %2829 = vmatprep.subr.mxu0 0.0
    %v2830 = vand.u32 %v580, 4294901760
    %2831 = vmatpush1.msra.mxu0 %v2830
    %2832 = vmatprep.subr.mxu0 0.0
    %v2833 = vand.u32 %v581, 4294901760
    %2834 = vmatpush1.msra.mxu0 %v2833
    %2835 = vmatprep.subr.mxu0 0.0
    %v2836 = vand.u32 %v582, 4294901760
    %2837 = vmatpush1.msra.mxu0 %v2836
    %2838 = vmatprep.subr.mxu0 0.0
    %v2839 = vand.u32 %v583, 4294901760
    %2840 = vmatpush1.msra.mxu0 %v2839
    %2841 = vmatprep.subr.mxu0 0.0
    %v2842 = vand.u32 %v584, 4294901760
    %2843 = vmatpush1.msra.mxu0 %v2842
    %2844 = vmatprep.subr.mxu0 0.0
    %v2845 = vand.u32 %v585, 4294901760
    %2846 = vmatpush1.msra.mxu0 %v2845
    %2847 = vmatprep.subr.mxu0 0.0
    %v2848 = vand.u32 %v586, 4294901760
    %2849 = vmatpush1.msra.mxu0 %v2848
    %2850 = vmatprep.subr.mxu0 0.0
    %v2851 = vand.u32 %v587, 4294901760
    %2852 = vmatpush1.msra.mxu0 %v2851
    %2853 = vmatprep.subr.mxu0 0.0
    %v2854 = vand.u32 %v588, 4294901760
    %2855 = vmatpush1.msra.mxu0 %v2854
    %2856 = vmatprep.subr.mxu0 0.0
    %v2857 = vand.u32 %v589, 4294901760
    %2858 = vmatpush1.msra.mxu0 %v2857
    %2859 = vmatprep.subr.mxu0 0.0
    %v2860 = vand.u32 %v590, 4294901760
    %2861 = vmatpush1.msra.mxu0 %v2860
    %2862 = vmatprep.subr.mxu0 0.0
    %v2863 = vand.u32 %v591, 4294901760
    %2864 = vmatpush1.msra.mxu0 %v2863
    %2865 = vmatprep.subr.mxu0 0.0
    %v2866 = vand.u32 %v592, 4294901760
    %2867 = vmatpush1.msra.mxu0 %v2866
    %2868 = vmatprep.subr.mxu0 0.0
    %v2869 = vand.u32 %v593, 4294901760
    %2870 = vmatpush1.msra.mxu0 %v2869
    %2871 = vmatprep.subr.mxu0 0.0
    %v2872 = vand.u32 %v594, 4294901760
    %2873 = vmatpush1.msra.mxu0 %v2872
    %2874 = vmatprep.subr.mxu0 0.0
    %v2875 = vand.u32 %v595, 4294901760
    %2876 = vmatpush1.msra.mxu0 %v2875
    %2877 = vmatprep.subr.mxu0 0.0
    %v2878 = vand.u32 %v596, 4294901760
    %2879 = vmatpush1.msra.mxu0 %v2878
    %2880 = vmatprep.subr.mxu0 0.0
    %v2881 = vand.u32 %v597, 4294901760
    %2882 = vmatpush1.msra.mxu0 %v2881
    %2883 = vmatprep.subr.mxu0 0.0
    %v2884 = vand.u32 %v598, 4294901760
    %2885 = vmatpush1.msra.mxu0 %v2884
    %2886 = vmatprep.subr.mxu0 0.0
    %v2887 = vand.u32 %v599, 4294901760
    %2888 = vmatpush1.msra.mxu0 %v2887
    %2889 = vmatprep.subr.mxu0 0.0
    %v2890 = vand.u32 %v600, 4294901760
    %2891 = vmatpush1.msra.mxu0 %v2890
    %2892 = vmatprep.subr.mxu0 0.0
    %v2893 = vand.u32 %v601, 4294901760
    %2894 = vmatpush1.msra.mxu0 %v2893
    %2895 = vmatprep.subr.mxu0 0.0
    %v2896 = vand.u32 %v602, 4294901760
    %2897 = vmatpush1.msra.mxu0 %v2896
    %2898 = vmatprep.subr.mxu0 0.0
    %v2899 = vand.u32 %v603, 4294901760
    %2900 = vmatpush1.msra.mxu0 %v2899
    %2901 = vmatprep.subr.mxu0 0.0
    %v2902 = vand.u32 %v604, 4294901760
    %2903 = vmatpush1.msra.mxu0 %v2902
    %2904 = vmatprep.subr.mxu0 0.0
    %v2905 = vand.u32 %v605, 4294901760
    %2906 = vmatpush1.msra.mxu0 %v2905
    %2907 = vmatprep.subr.mxu0 0.0
    %v2908 = vand.u32 %v606, 4294901760
    %2909 = vmatpush1.msra.mxu0 %v2908
    %2910 = vmatprep.subr.mxu0 0.0
    %v2911 = vand.u32 %v607, 4294901760
    %2912 = vmatpush1.msra.mxu0 %v2911
    %2913 = vmatprep.subr.mxu0 0.0
    %v2914 = vand.u32 %v608, 4294901760
    %2915 = vmatpush1.msra.mxu0 %v2914
    %2916 = vmatprep.subr.mxu0 0.0
    %v2917 = vand.u32 %v609, 4294901760
    %2918 = vmatpush1.msra.mxu0 %v2917
    %v2919 = vand.u32 %v513, 4294901760
    %v2920 = vsub.f32 %v513, %v2919
    %v2921 = vand.u32 %v2920, 4294901760
    %2922 = vmatprep.mubr.f32.mxu0 %v2921
    %v2923 = vand.u32 %v512, 4294901760
    %v2924 = vsub.f32 %v512, %v2923
    %v2925 = vand.u32 %v2924, 4294901760
    %2926 = vmatmul.mubr.f32.gmra.mrb[0].mxu0 %v2925
    %v2927 = vpop.f32.mrb[0].mxu0
    %v2928 = vadd.f32 %v2820, %v2927
    %v2929 = vpop.f32.mrb[0].mxu0
    %2930 = vdwg.mxu0
    %2931 = vmatprep.subr.mxu0 0.0
    %v2932 = vand.u32 %v578, 4294901760
    %v2933 = vsub.f32 %v578, %v2932
    %v2934 = vand.u32 %v2933, 4294901760
    %2935 = vmatpush1.msra.mxu0 %v2934
    %2936 = vmatprep.subr.mxu0 0.0
    %v2937 = vand.u32 %v579, 4294901760
    %v2938 = vsub.f32 %v579, %v2937
    %v2939 = vand.u32 %v2938, 4294901760
    %2940 = vmatpush1.msra.mxu0 %v2939
    %2941 = vmatprep.subr.mxu0 0.0
    %v2942 = vand.u32 %v580, 4294901760
    %v2943 = vsub.f32 %v580, %v2942
    %v2944 = vand.u32 %v2943, 4294901760
    %2945 = vmatpush1.msra.mxu0 %v2944
    %2946 = vmatprep.subr.mxu0 0.0
    %v2947 = vand.u32 %v581, 4294901760
    %v2948 = vsub.f32 %v581, %v2947
    %v2949 = vand.u32 %v2948, 4294901760
    %2950 = vmatpush1.msra.mxu0 %v2949
    %2951 = vmatprep.subr.mxu0 0.0
    %v2952 = vand.u32 %v582, 4294901760
    %v2953 = vsub.f32 %v582, %v2952
    %v2954 = vand.u32 %v2953, 4294901760
    %2955 = vmatpush1.msra.mxu0 %v2954
    %2956 = vmatprep.subr.mxu0 0.0
    %v2957 = vand.u32 %v583, 4294901760
    %v2958 = vsub.f32 %v583, %v2957
    %v2959 = vand.u32 %v2958, 4294901760
    %2960 = vmatpush1.msra.mxu0 %v2959
    %2961 = vmatprep.subr.mxu0 0.0
    %v2962 = vand.u32 %v584, 4294901760
    %v2963 = vsub.f32 %v584, %v2962
    %v2964 = vand.u32 %v2963, 4294901760
    %2965 = vmatpush1.msra.mxu0 %v2964
    %2966 = vmatprep.subr.mxu0 0.0
    %v2967 = vand.u32 %v585, 4294901760
    %v2968 = vsub.f32 %v585, %v2967
    %v2969 = vand.u32 %v2968, 4294901760
    %2970 = vmatpush1.msra.mxu0 %v2969
    %2971 = vmatprep.subr.mxu0 0.0
    %v2972 = vand.u32 %v586, 4294901760
    %v2973 = vsub.f32 %v586, %v2972
    %v2974 = vand.u32 %v2973, 4294901760
    %2975 = vmatpush1.msra.mxu0 %v2974
    %2976 = vmatprep.subr.mxu0 0.0
    %v2977 = vand.u32 %v587, 4294901760
    %v2978 = vsub.f32 %v587, %v2977
    %v2979 = vand.u32 %v2978, 4294901760
    %2980 = vmatpush1.msra.mxu0 %v2979
    %2981 = vmatprep.subr.mxu0 0.0
    %v2982 = vand.u32 %v588, 4294901760
    %v2983 = vsub.f32 %v588, %v2982
    %v2984 = vand.u32 %v2983, 4294901760
    %2985 = vmatpush1.msra.mxu0 %v2984
    %2986 = vmatprep.subr.mxu0 0.0
    %v2987 = vand.u32 %v589, 4294901760
    %v2988 = vsub.f32 %v589, %v2987
    %v2989 = vand.u32 %v2988, 4294901760
    %2990 = vmatpush1.msra.mxu0 %v2989
    %2991 = vmatprep.subr.mxu0 0.0
    %v2992 = vand.u32 %v590, 4294901760
    %v2993 = vsub.f32 %v590, %v2992
    %v2994 = vand.u32 %v2993, 4294901760
    %2995 = vmatpush1.msra.mxu0 %v2994
    %2996 = vmatprep.subr.mxu0 0.0
    %v2997 = vand.u32 %v591, 4294901760
    %v2998 = vsub.f32 %v591, %v2997
    %v2999 = vand.u32 %v2998, 4294901760
    %3000 = vmatpush1.msra.mxu0 %v2999
    %3001 = vmatprep.subr.mxu0 0.0
    %v3002 = vand.u32 %v592, 4294901760
    %v3003 = vsub.f32 %v592, %v3002
    %v3004 = vand.u32 %v3003, 4294901760
    %3005 = vmatpush1.msra.mxu0 %v3004
    %3006 = vmatprep.subr.mxu0 0.0
    %v3007 = vand.u32 %v593, 4294901760
    %v3008 = vsub.f32 %v593, %v3007
    %v3009 = vand.u32 %v3008, 4294901760
    %3010 = vmatpush1.msra.mxu0 %v3009
    %3011 = vmatprep.subr.mxu0 0.0
    %v3012 = vand.u32 %v594, 4294901760
    %v3013 = vsub.f32 %v594, %v3012
    %v3014 = vand.u32 %v3013, 4294901760
    %3015 = vmatpush1.msra.mxu0 %v3014
    %3016 = vmatprep.subr.mxu0 0.0
    %v3017 = vand.u32 %v595, 4294901760
    %v3018 = vsub.f32 %v595, %v3017
    %v3019 = vand.u32 %v3018, 4294901760
    %3020 = vmatpush1.msra.mxu0 %v3019
    %3021 = vmatprep.subr.mxu0 0.0
    %v3022 = vand.u32 %v596, 4294901760
    %v3023 = vsub.f32 %v596, %v3022
    %v3024 = vand.u32 %v3023, 4294901760
    %3025 = vmatpush1.msra.mxu0 %v3024
    %3026 = vmatprep.subr.mxu0 0.0
    %v3027 = vand.u32 %v597, 4294901760
    %v3028 = vsub.f32 %v597, %v3027
    %v3029 = vand.u32 %v3028, 4294901760
    %3030 = vmatpush1.msra.mxu0 %v3029
    %3031 = vmatprep.subr.mxu0 0.0
    %v3032 = vand.u32 %v598, 4294901760
    %v3033 = vsub.f32 %v598, %v3032
    %v3034 = vand.u32 %v3033, 4294901760
    %3035 = vmatpush1.msra.mxu0 %v3034
    %3036 = vmatprep.subr.mxu0 0.0
    %v3037 = vand.u32 %v599, 4294901760
    %v3038 = vsub.f32 %v599, %v3037
    %v3039 = vand.u32 %v3038, 4294901760
    %3040 = vmatpush1.msra.mxu0 %v3039
    %3041 = vmatprep.subr.mxu0 0.0
    %v3042 = vand.u32 %v600, 4294901760
    %v3043 = vsub.f32 %v600, %v3042
    %v3044 = vand.u32 %v3043, 4294901760
    %3045 = vmatpush1.msra.mxu0 %v3044
    %3046 = vmatprep.subr.mxu0 0.0
    %v3047 = vand.u32 %v601, 4294901760
    %v3048 = vsub.f32 %v601, %v3047
    %v3049 = vand.u32 %v3048, 4294901760
    %3050 = vmatpush1.msra.mxu0 %v3049
    %3051 = vmatprep.subr.mxu0 0.0
    %v3052 = vand.u32 %v602, 4294901760
    %v3053 = vsub.f32 %v602, %v3052
    %v3054 = vand.u32 %v3053, 4294901760
    %3055 = vmatpush1.msra.mxu0 %v3054
    %3056 = vmatprep.subr.mxu0 0.0
    %v3057 = vand.u32 %v603, 4294901760
    %v3058 = vsub.f32 %v603, %v3057
    %v3059 = vand.u32 %v3058, 4294901760
    %3060 = vmatpush1.msra.mxu0 %v3059
    %3061 = vmatprep.subr.mxu0 0.0
    %v3062 = vand.u32 %v604, 4294901760
    %v3063 = vsub.f32 %v604, %v3062
    %v3064 = vand.u32 %v3063, 4294901760
    %3065 = vmatpush1.msra.mxu0 %v3064
    %3066 = vmatprep.subr.mxu0 0.0
    %v3067 = vand.u32 %v605, 4294901760
    %v3068 = vsub.f32 %v605, %v3067
    %v3069 = vand.u32 %v3068, 4294901760
    %3070 = vmatpush1.msra.mxu0 %v3069
    %3071 = vmatprep.subr.mxu0 0.0
    %v3072 = vand.u32 %v606, 4294901760
    %v3073 = vsub.f32 %v606, %v3072
    %v3074 = vand.u32 %v3073, 4294901760
    %3075 = vmatpush1.msra.mxu0 %v3074
    %3076 = vmatprep.subr.mxu0 0.0
    %v3077 = vand.u32 %v607, 4294901760
    %v3078 = vsub.f32 %v607, %v3077
    %v3079 = vand.u32 %v3078, 4294901760
    %3080 = vmatpush1.msra.mxu0 %v3079
    %3081 = vmatprep.subr.mxu0 0.0
    %v3082 = vand.u32 %v608, 4294901760
    %v3083 = vsub.f32 %v608, %v3082
    %v3084 = vand.u32 %v3083, 4294901760
    %3085 = vmatpush1.msra.mxu0 %v3084
    %3086 = vmatprep.subr.mxu0 0.0
    %v3087 = vand.u32 %v609, 4294901760
    %v3088 = vsub.f32 %v609, %v3087
    %v3089 = vand.u32 %v3088, 4294901760
    %3090 = vmatpush1.msra.mxu0 %v3089
    %v3091 = vand.u32 %v513, 4294901760
    %3092 = vmatprep.mubr.f32.mxu0 %v3091
    %v3093 = vand.u32 %v512, 4294901760
    %3094 = vmatmul.mubr.f32.gmra.mrb[0].mxu0 %v3093
    %v3095 = vpop.f32.mrb[0].mxu0
    %v3096 = vadd.f32 %v2928, %v3095
    %v3097 = vpop.f32.mrb[0].mxu0
    %3098 = vdwg.mxu0
    %3099 = vmatprep.subr.mxu0 0.0
    %v3100 = vand.u32 %v578, 4294901760
    %3101 = vmatpush1.msra.mxu0 %v3100
    %3102 = vmatprep.subr.mxu0 0.0
    %v3103 = vand.u32 %v579, 4294901760
    %3104 = vmatpush1.msra.mxu0 %v3103
    %3105 = vmatprep.subr.mxu0 0.0
    %v3106 = vand.u32 %v580, 4294901760
    %3107 = vmatpush1.msra.mxu0 %v3106
    %3108 = vmatprep.subr.mxu0 0.0
    %v3109 = vand.u32 %v581, 4294901760
    %3110 = vmatpush1.msra.mxu0 %v3109
    %3111 = vmatprep.subr.mxu0 0.0
    %v3112 = vand.u32 %v582, 4294901760
    %3113 = vmatpush1.msra.mxu0 %v3112
    %3114 = vmatprep.subr.mxu0 0.0
    %v3115 = vand.u32 %v583, 4294901760
    %3116 = vmatpush1.msra.mxu0 %v3115
    %3117 = vmatprep.subr.mxu0 0.0
    %v3118 = vand.u32 %v584, 4294901760
    %3119 = vmatpush1.msra.mxu0 %v3118
    %3120 = vmatprep.subr.mxu0 0.0
    %v3121 = vand.u32 %v585, 4294901760
    %3122 = vmatpush1.msra.mxu0 %v3121
    %3123 = vmatprep.subr.mxu0 0.0
    %v3124 = vand.u32 %v586, 4294901760
    %3125 = vmatpush1.msra.mxu0 %v3124
    %3126 = vmatprep.subr.mxu0 0.0
    %v3127 = vand.u32 %v587, 4294901760
    %3128 = vmatpush1.msra.mxu0 %v3127
    %3129 = vmatprep.subr.mxu0 0.0
    %v3130 = vand.u32 %v588, 4294901760
    %3131 = vmatpush1.msra.mxu0 %v3130
    %3132 = vmatprep.subr.mxu0 0.0
    %v3133 = vand.u32 %v589, 4294901760
    %3134 = vmatpush1.msra.mxu0 %v3133
    %3135 = vmatprep.subr.mxu0 0.0
    %v3136 = vand.u32 %v590, 4294901760
    %3137 = vmatpush1.msra.mxu0 %v3136
    %3138 = vmatprep.subr.mxu0 0.0
    %v3139 = vand.u32 %v591, 4294901760
    %3140 = vmatpush1.msra.mxu0 %v3139
    %3141 = vmatprep.subr.mxu0 0.0
    %v3142 = vand.u32 %v592, 4294901760
    %3143 = vmatpush1.msra.mxu0 %v3142
    %3144 = vmatprep.subr.mxu0 0.0
    %v3145 = vand.u32 %v593, 4294901760
    %3146 = vmatpush1.msra.mxu0 %v3145
    %3147 = vmatprep.subr.mxu0 0.0
    %v3148 = vand.u32 %v594, 4294901760
    %3149 = vmatpush1.msra.mxu0 %v3148
    %3150 = vmatprep.subr.mxu0 0.0
    %v3151 = vand.u32 %v595, 4294901760
    %3152 = vmatpush1.msra.mxu0 %v3151
    %3153 = vmatprep.subr.mxu0 0.0
    %v3154 = vand.u32 %v596, 4294901760
    %3155 = vmatpush1.msra.mxu0 %v3154
    %3156 = vmatprep.subr.mxu0 0.0
    %v3157 = vand.u32 %v597, 4294901760
    %3158 = vmatpush1.msra.mxu0 %v3157
    %3159 = vmatprep.subr.mxu0 0.0
    %v3160 = vand.u32 %v598, 4294901760
    %3161 = vmatpush1.msra.mxu0 %v3160
    %3162 = vmatprep.subr.mxu0 0.0
    %v3163 = vand.u32 %v599, 4294901760
    %3164 = vmatpush1.msra.mxu0 %v3163
    %3165 = vmatprep.subr.mxu0 0.0
    %v3166 = vand.u32 %v600, 4294901760
    %3167 = vmatpush1.msra.mxu0 %v3166
    %3168 = vmatprep.subr.mxu0 0.0
    %v3169 = vand.u32 %v601, 4294901760
    %3170 = vmatpush1.msra.mxu0 %v3169
    %3171 = vmatprep.subr.mxu0 0.0
    %v3172 = vand.u32 %v602, 4294901760
    %3173 = vmatpush1.msra.mxu0 %v3172
    %3174 = vmatprep.subr.mxu0 0.0
    %v3175 = vand.u32 %v603, 4294901760
    %3176 = vmatpush1.msra.mxu0 %v3175
    %3177 = vmatprep.subr.mxu0 0.0
    %v3178 = vand.u32 %v604, 4294901760
    %3179 = vmatpush1.msra.mxu0 %v3178
    %3180 = vmatprep.subr.mxu0 0.0
    %v3181 = vand.u32 %v605, 4294901760
    %3182 = vmatpush1.msra.mxu0 %v3181
    %3183 = vmatprep.subr.mxu0 0.0
    %v3184 = vand.u32 %v606, 4294901760
    %3185 = vmatpush1.msra.mxu0 %v3184
    %3186 = vmatprep.subr.mxu0 0.0
    %v3187 = vand.u32 %v607, 4294901760
    %3188 = vmatpush1.msra.mxu0 %v3187
    %3189 = vmatprep.subr.mxu0 0.0
    %v3190 = vand.u32 %v608, 4294901760
    %3191 = vmatpush1.msra.mxu0 %v3190
    %3192 = vmatprep.subr.mxu0 0.0
    %v3193 = vand.u32 %v609, 4294901760
    %3194 = vmatpush1.msra.mxu0 %v3193
    %v3195 = vand.u32 %v513, 4294901760
    %3196 = vmatprep.mubr.f32.mxu0 %v3195
    %v3197 = vand.u32 %v512, 4294901760
    %3198 = vmatmul.mubr.f32.gmra.mrb[0].mxu0 %v3197
    %v3199 = vpop.f32.mrb[0].mxu0
    %v3200 = vadd.f32 %v3096, %v3199
    %v3201 = vpop.f32.mrb[0].mxu0
    %3202 = vdwg.mxu0
    %3203 = vst [vmem:[%s3] sm:$0xff] %v3200
  $region21: #{mlp_head_sum.1} parent=0 // pred_fallthru
    _
  // Predicated region
  $region22: #{mlp_head_sum.1} parent=0 // pred_check
    _
  $region23: #{mlp_head_sum.1} parent=0 // pred_check_branch
    %3205 = sbr.rel (0) target = $region25
  $region24: #{mlp_head_sum.1} parent=0 // pred_region
    _
  $region25: #{mlp_head_sum.1} parent=0 // pred_fallthru
    _
  // Predicated region
  $region26: #{mlp_head_sum.1} parent=0 // pred_check
    _
  $region27: #{mlp_head_sum.1} parent=0 // pred_check_branch
    %3207 = sbr.rel (0) target = $region29
  $region28: #{mlp_head_sum.1} parent=0 // pred_region
    _
  $region29: #{mlp_head_sum.1} parent=0 // pred_fallthru
    _

</llo_original>
